<compile_context>
chip_gen: v7x
topology: tpu7x:2x2x1
jax: 0.10.0
libtpu: 0.0.40
codegen_flags: <defaults>
</compile_context>

<pallas_src>
import functools

import jax
import jax.numpy as jnp
import numpy as np
from jax.experimental import pallas as pl
from jax.experimental.pallas import tpu as pltpu


def _round_up(n, m):
    return -(-n // m) * m


def temporal_kernel(xcol_ref, cw_ref, cb_ref, wih_ref, bx_ref, whh_ref,
                    out_ref, gx, *, T, H, BT, fuse_dirs):
    """One batch tile, time-major 2D layout (row r = t*BT + b_local).

    xcol_ref: (T*BT, 3C)   im2col'd input (built lane-dense in the wrapper), matmul dtype
    cw_ref  : (3C, H)      im2col conv weight (taps stacked along K), matmul dtype
    cb_ref  : (1, H)       conv bias, f32
    wih_ref : (H, 8H)      [W_ih_fwd | W_ih_bwd] (pre-transposed), matmul dtype
    bx_ref  : (1, 8H)      [b_fwd | b_bwd] (b_ih + b_hh, both directions), f32
    whh_ref : (2H, 8H)     blockdiag(Whh_f, Whh_b) (pre-transposed), matmul dtype
    out_ref : (T*BT, 2H)   fwd hidden in lanes [:H], bwd hidden in lanes [H:], f32
    gx      : (T*BT, 8H)   f32 scratch: hoisted input-projection gates for both directions
    """
    # ---------- Conv1d(k=3, s=1, p=1) + ReLU as one matmul --------------------------
    conv = jnp.maximum(
        jnp.dot(xcol_ref[...], cw_ref[...], preferred_element_type=jnp.float32)
        + cb_ref[...], 0.0)                                       # (R, H) f32

    # ---------- Hoisted input projection for BOTH LSTM directions -------------------
    gx[...] = (jnp.dot(conv.astype(wih_ref.dtype), wih_ref[...],
                       preferred_element_type=jnp.float32)
               + bx_ref[...])                                     # (R, 8H) f32

    whh = whh_ref[...]                                            # (2H, 8H) block-diag
    if not fuse_dirs:
        # One-time static slices outside the loop (block-diag layout -> per-dir weights).
        whh_f = whh[0:H, 0:4 * H]
        whh_b = whh[H:2 * H, 4 * H:8 * H]

    def gates_to_hc(gates, c):
        # Gate order i, f, g, o (matches nn.LSTM). One full-width sigmoid pass (i, f, o
        # plus a wasted g slice -- same EUP issue count as one vreg), tanh only on g.
        s = jax.nn.sigmoid(gates)                                 # (BT, 4H)
        i = s[:, 0:H]
        f = s[:, H:2 * H]
        o = s[:, 3 * H:4 * H]
        g = jnp.tanh(gates[:, 2 * H:3 * H])
        c_new = f * c + i * g
        h_new = o * jnp.tanh(c_new)
        return h_new, c_new

    # ---------- Fused forward + backward recurrence (batched over BT) ----------------
    def body(s, carry):
        h_f, c_f, h_b, c_b = carry
        rf = pl.multiple_of(s * BT, 8)                            # forward  timestep s
        rb = pl.multiple_of((T - 1 - s) * BT, 8)                  # backward timestep T-1-s

        if fuse_dirs:
            hh = jnp.concatenate([h_f, h_b], axis=-1).astype(whh.dtype)   # (BT, 2H)
            hg = jnp.dot(hh, whh, preferred_element_type=jnp.float32)     # (BT, 8H)
            g_f = gx[pl.ds(rf, BT), 0:4 * H] + hg[:, 0:4 * H]
            g_b = gx[pl.ds(rb, BT), 4 * H:8 * H] + hg[:, 4 * H:8 * H]
        else:
            g_f = gx[pl.ds(rf, BT), 0:4 * H] + jnp.dot(
                h_f.astype(whh.dtype), whh_f, preferred_element_type=jnp.float32)
            g_b = gx[pl.ds(rb, BT), 4 * H:8 * H] + jnp.dot(
                h_b.astype(whh.dtype), whh_b, preferred_element_type=jnp.float32)

        h_f, c_f = gates_to_hc(g_f, c_f)
        h_b, c_b = gates_to_hc(g_b, c_b)

        out_ref[pl.ds(rf, BT), 0:H] = h_f
        out_ref[pl.ds(rb, BT), H:2 * H] = h_b
        return (h_f, c_f, h_b, c_b)

    z = jnp.zeros((BT, H), jnp.float32)
    # Full unroll only for short sequences; cap otherwise to bound vreg pressure.
    unroll = True if T <= 32 else 8
    jax.lax.fori_loop(0, T, body, (z, z, z, z), unroll=unroll)


def temporal_forward(x, params, *, matmul_dtype=jnp.float32, bt_cap=64):
    """x: (B, T, C_in) float32 -> (B, T, 2*H) float32 (same semantics as Temporal.forward)."""
    B, T, C = x.shape
    H = params["cb"].shape[-1]

    # ---------------- wrapper-side im2col (lane-dense input slab) --------------------
    xl = jnp.pad(x, ((0, 0), (1, 0), (0, 0)))[:, :T]      # x[t-1], zero at t == 0
    xr = jnp.pad(x, ((0, 0), (0, 1), (0, 0)))[:, 1:]      # x[t+1], zero at t == T-1
    xcol = jnp.concatenate([xl, x, xr], axis=-1).astype(matmul_dtype)   # (B, T, 3C)

    # ---------------- batch-tile / VMEM budgeting -------------------------------------
    mdt_size = np.dtype(matmul_dtype).itemsize

    def vmem_need(bt):
        x_blk = T * bt * 3 * C * mdt_size * 2              # double-buffered input block
        o_blk = T * bt * 2 * H * 4 * 2                     # double-buffered output block
        gx_sc = T * bt * 8 * H * 4                         # gx scratch (f32)
        wts = (3 * C * H + 8 * H * H + 16 * H * H) * mdt_size + (H + 8 * H) * 4
        return x_blk + o_blk + gx_sc + wts

    try:
        vmem_cap = int(pltpu.get_tpu_info().vmem_capacity_bytes)
    except Exception:
        vmem_cap = 64 << 20                                # conservative (v7x per-TC)

    BT = min(_round_up(B, 8), bt_cap)                      # batch tile, multiple of 8
    while BT > 8 and vmem_need(BT) > 0.7 * vmem_cap:
        BT -= 8
    BT = max(BT, 8)

    G = -(-B // BT)                                        # number of batch tiles
    Bp = G * BT
    if Bp != B:
        xcol = jnp.pad(xcol, ((0, Bp - B), (0, 0), (0, 0)))

    # (Bp, T, 3C) -> (G, T*BT, 3C), time-major inside each tile: row r = t*BT + b_local.
    xt = xcol.reshape(G, BT, T, 3 * C).transpose(0, 2, 1, 3).reshape(G, T * BT, 3 * C)

    # ---------------- weight prep (cast matmul operands; keep biases f32) --------------
    cw3 = params["cw"].reshape(3 * C, H).astype(matmul_dtype)                      # (3C, H)
    wih_cat = jnp.concatenate(
        [params["wih_f"], params["wih_b"]], axis=1).astype(matmul_dtype)           # (H, 8H)
    b_cat = jnp.concatenate([params["b_f"], params["b_b"]], axis=1)                # (1, 8H) f32
    z4 = jnp.zeros((H, 4 * H), matmul_dtype)
    whh_blk = jnp.concatenate([
        jnp.concatenate([params["whh_f"].astype(matmul_dtype), z4], axis=1),
        jnp.concatenate([z4, params["whh_b"].astype(matmul_dtype)], axis=1)],
        axis=0)                                                                    # (2H, 8H)

    fuse_dirs = (8 * H <= 256)   # one 256-wide MXU push/step on v6e/v7x; neutral on v5e

    vmem_limit = int(min(vmem_cap, max(2 * vmem_need(BT), 32 << 20)))

    kern = functools.partial(temporal_kernel, T=T, H=H, BT=BT, fuse_dirs=fuse_dirs)
    const = lambda g: (0, 0)

    out = pl.pallas_call(
        kern,
        out_shape=jax.ShapeDtypeStruct((G, T * BT, 2 * H), jnp.float32),
        grid_spec=pltpu.PrefetchScalarGridSpec(
            num_scalar_prefetch=0,
            grid=(G,),
            in_specs=[
                pl.BlockSpec((None, T * BT, 3 * C), lambda g: (g, 0, 0)),  # im2col'd x tile
                pl.BlockSpec((3 * C, H), const),                           # conv weight
                pl.BlockSpec((1, H), const),                               # conv bias
                pl.BlockSpec((H, 8 * H), const),                           # [Wih_f | Wih_b]
                pl.BlockSpec((1, 8 * H), const),                           # [b_f | b_b]
                pl.BlockSpec((2 * H, 8 * H), const),                       # blockdiag(Whh_f, Whh_b)
            ],
            out_specs=pl.BlockSpec((None, T * BT, 2 * H), lambda g: (g, 0, 0)),
            scratch_shapes=[
                pltpu.VMEM((T * BT, 8 * H), jnp.float32),                  # hoisted gates_x
            ],
        ),
        compiler_params=pltpu.CompilerParams(
            dimension_semantics=("parallel",),
            vmem_limit_bytes=vmem_limit),
    )(xt, cw3, params["cb"], wih_cat, b_cat, whh_blk)

    # (G, T*BT, 2H) time-major -> (B, T, 2H) batch-major (layout plumbing only).
    out = out.reshape(G, T, BT, 2 * H).transpose(0, 2, 1, 3).reshape(Bp, T, 2 * H)
    return out[:B]


# --------------------------- pure-JAX reference ---------------------------------
def temporal_reference(x, params):
    H = params["cb"].shape[-1]
    xpad = jnp.pad(x, ((0, 0), (1, 1), (0, 0)))
    y = (xpad[:, :-2] @ params["cw"][0]
         + xpad[:, 1:-1] @ params["cw"][1]
         + xpad[:, 2:] @ params["cw"][2]
         + params["cb"])
    y = jnp.maximum(y, 0.0)

    def run_dir(y, wih, whh, b, reverse):
        B = y.shape[0]

        def scan_fn(carry, x_t):
            h, c = carry
            gates = x_t @ wih + h @ whh + b[0]
            i = jax.nn.sigmoid(gates[:, :H])
            f = jax.nn.sigmoid(gates[:, H:2 * H])
            g = jnp.tanh(gates[:, 2 * H:3 * H])
            o = jax.nn.sigmoid(gates[:, 3 * H:])
            c = f * c + i * g
            h = o * jnp.tanh(c)
            return (h, c), h

        xs = jnp.swapaxes(y, 0, 1)
        if reverse:
            xs = xs[::-1]
        init = (jnp.zeros((B, H)), jnp.zeros((B, H)))
        _, hs = jax.lax.scan(scan_fn, init, xs)
        if reverse:
            hs = hs[::-1]
        return jnp.swapaxes(hs, 0, 1)

    hf = run_dir(y, params["wih_f"], params["whh_f"], params["b_f"], False)
    hb = run_dir(y, params["wih_b"], params["whh_b"], params["b_b"], True)
    return jnp.concatenate([hf, hb], axis=-1)


def init_params(key, input_size, out_size):
    """Deterministic params; stored pre-transposed for the kernel.

    PyTorch shapes:
      conv weight (H, C, 3)  -> cw[k]  = W[:, :, k].T  : (3, C, H)
      conv bias   (H,)       -> cb                     : (1, H)
      lstm W_ih   (4H, H)    -> wih    = W_ih.T        : (H, 4H)   gate order i,f,g,o
      lstm W_hh   (4H, H)    -> whh    = W_hh.T        : (H, 4H)
      lstm biases b_ih+b_hh  -> b                      : (1, 4H)
    """
    C, H = input_size, out_size
    ks = jax.random.split(key, 10)
    k_conv = 1.0 / np.sqrt(C * 3)
    k_lstm = 1.0 / np.sqrt(H)
    u = lambda k, shape, s: jax.random.uniform(k, shape, jnp.float32, -s, s)
    return dict(
        cw=u(ks[0], (3, C, H), k_conv),
        cb=u(ks[1], (1, H), k_conv),
        wih_f=u(ks[2], (H, 4 * H), k_lstm),
        whh_f=u(ks[3], (H, 4 * H), k_lstm),
        b_f=u(ks[4], (1, 4 * H), k_lstm) + u(ks[5], (1, 4 * H), k_lstm),
        wih_b=u(ks[6], (H, 4 * H), k_lstm),
        whh_b=u(ks[7], (H, 4 * H), k_lstm),
        b_b=u(ks[8], (1, 4 * H), k_lstm) + u(ks[9], (1, 4 * H), k_lstm),
    )


if __name__ == "__main__":
    B, T, C_in, H = 2, 8, 4, 32          # batch, seq, input_size, out_size
    key = jax.random.PRNGKey(0)
    kx, kp = jax.random.split(key)
    x = jax.random.normal(kx, (B, T, C_in), jnp.float32)
    params = init_params(kp, C_in, H)

    ref = jax.block_until_ready(temporal_reference(x, params))

    # f32 matmul mode: exact parity with the f32 reference.
    fwd_f32 = jax.jit(functools.partial(temporal_forward, matmul_dtype=jnp.float32))
    out_f32 = jax.block_until_ready(fwd_f32(x, params))
    assert out_f32.shape == (B, T, 2 * H), out_f32.shape
    np.testing.assert_allclose(np.asarray(out_f32), np.asarray(ref), rtol=2e-3, atol=2e-3)

    # bf16 matmul-input mode (f32 accumulation + f32 elementwise): perf mode, bf16 tolerance.
    fwd_bf16 = jax.jit(functools.partial(temporal_forward, matmul_dtype=jnp.bfloat16))
    out_bf16 = jax.block_until_ready(fwd_bf16(x, params))
    np.testing.assert_allclose(np.asarray(out_bf16), np.asarray(ref), rtol=5e-2, atol=5e-2)

    print("KERNEL_OK")
</pallas_src>

<mosaic_0001>
module attributes {stable_mosaic.version = 11 : i64} {
  func.func @temporal_kernel(%arg0: i32, %arg1: memref<1x64x12xf32, #tpu.memory_space<vmem>>, %arg2: memref<12x32xf32, #tpu.memory_space<vmem>>, %arg3: memref<1x32xf32, #tpu.memory_space<vmem>>, %arg4: memref<32x256xf32, #tpu.memory_space<vmem>>, %arg5: memref<1x256xf32, #tpu.memory_space<vmem>>, %arg6: memref<64x256xf32, #tpu.memory_space<vmem>>, %arg7: memref<1x64x64xf32, #tpu.memory_space<vmem>>, %arg8: memref<64x256xf32, #tpu.memory_space<vmem>>) attributes {dimension_semantics = [#tpu.dimension_semantics<parallel>], iteration_bounds = array<i64: 1>, scalar_prefetch = 0 : i64, scratch_operands = 1 : i64, tpu.core_type = #tpu.core_type<tc>, window_params = [{transform_indices = @transform_0, window_bounds = array<i64: 1, 64, 12>}, {pipeline_mode = #tpu.pipeline_mode<synchronous>, transform_indices = @transform_1, window_bounds = array<i64: 12, 32>}, {pipeline_mode = #tpu.pipeline_mode<synchronous>, transform_indices = @transform_2, window_bounds = array<i64: 1, 32>}, {pipeline_mode = #tpu.pipeline_mode<synchronous>, transform_indices = @transform_3, window_bounds = array<i64: 32, 256>}, {pipeline_mode = #tpu.pipeline_mode<synchronous>, transform_indices = @transform_4, window_bounds = array<i64: 1, 256>}, {pipeline_mode = #tpu.pipeline_mode<synchronous>, transform_indices = @transform_5, window_bounds = array<i64: 64, 256>}, {transform_indices = @transform_6, window_bounds = array<i64: 1, 64, 64>}]} {
    %c0 = arith.constant 0 : index
    %c0_0 = arith.constant 0 : index
    %c0_1 = arith.constant 0 : index
    %0 = vector.load %arg1[%c0, %c0_0, %c0_1] : memref<1x64x12xf32, #tpu.memory_space<vmem>>, vector<1x64x12xf32>
    %1 = vector.shape_cast %0 : vector<1x64x12xf32> to vector<64x12xf32>
    %c0_2 = arith.constant 0 : index
    %c0_3 = arith.constant 0 : index
    %2 = vector.load %arg2[%c0_2, %c0_3] : memref<12x32xf32, #tpu.memory_space<vmem>>, vector<12x32xf32>
    %cst = arith.constant dense<0.000000e+00> : vector<64x32xf32>
    %3 = tpu.matmul %1, %2, %cst {dimension_numbers = #tpu.dot_dimension_numbers<[1], [0], [0], [1], [0, 0, 1, 1], [], []>} : vector<64x12xf32>, vector<12x32xf32>, vector<64x32xf32> -> vector<64x32xf32>
    %c0_4 = arith.constant 0 : index
    %c0_5 = arith.constant 0 : index
    %4 = vector.load %arg3[%c0_4, %c0_5] : memref<1x32xf32, #tpu.memory_space<vmem>>, vector<1x32xf32>
    %5 = vector.broadcast %4 : vector<1x32xf32> to vector<64x32xf32>
    %6 = arith.addf %3, %5 : vector<64x32xf32>
    %cst_6 = arith.constant 0.000000e+00 : f32
    %7 = vector.broadcast %cst_6 : f32 to vector<64x32xf32>
    %8 = arith.maximumf %6, %7 : vector<64x32xf32>
    %c0_7 = arith.constant 0 : index
    %c0_8 = arith.constant 0 : index
    %9 = vector.load %arg4[%c0_7, %c0_8] : memref<32x256xf32, #tpu.memory_space<vmem>>, vector<32x256xf32>
    %cst_9 = arith.constant dense<0.000000e+00> : vector<64x256xf32>
    %10 = tpu.matmul %8, %9, %cst_9 {dimension_numbers = #tpu.dot_dimension_numbers<[1], [0], [0], [1], [0, 0, 1, 1], [], []>} : vector<64x32xf32>, vector<32x256xf32>, vector<64x256xf32> -> vector<64x256xf32>
    %c0_10 = arith.constant 0 : index
    %c0_11 = arith.constant 0 : index
    %11 = vector.load %arg5[%c0_10, %c0_11] : memref<1x256xf32, #tpu.memory_space<vmem>>, vector<1x256xf32>
    %12 = vector.broadcast %11 : vector<1x256xf32> to vector<64x256xf32>
    %13 = arith.addf %10, %12 : vector<64x256xf32>
    %c0_12 = arith.constant 0 : index
    %c0_13 = arith.constant 0 : index
    %14 = vector.load %arg8[%c0_12, %c0_13] : memref<64x256xf32, #tpu.memory_space<vmem>>, vector<64x256xf32>
    tpu.vector_store %arg8[%c0_12, %c0_13], %13 {strides = array<i32>} : memref<64x256xf32, #tpu.memory_space<vmem>>, vector<64x256xf32>,
    %c0_14 = arith.constant 0 : index
    %c0_15 = arith.constant 0 : index
    %15 = vector.load %arg6[%c0_14, %c0_15] : memref<64x256xf32, #tpu.memory_space<vmem>>, vector<64x256xf32>
    %cst_16 = arith.constant 0.000000e+00 : f32
    %16 = vector.broadcast %cst_16 : f32 to vector<8x32xf32>
    %c0_i32 = arith.constant 0 : i32
    %c8_i32 = arith.constant 8 : i32
    %17 = arith.muli %c0_i32, %c8_i32 : i32
    %18 = tpu.assume_multiple %17, 8 : i32
    %c7_i32 = arith.constant 7 : i32
    %19 = arith.subi %c7_i32, %c0_i32 : i32
    %c8_i32_17 = arith.constant 8 : i32
    %20 = arith.muli %19, %c8_i32_17 : i32
    %21 = tpu.assume_multiple %20, 8 : i32
    %22 = tpu.concatenate %16, %16 in 1 : vector<8x32xf32>, vector<8x32xf32> -> vector<8x64xf32>
    %cst_18 = arith.constant dense<0.000000e+00> : vector<8x256xf32>
    %23 = tpu.matmul %22, %15, %cst_18 {dimension_numbers = #tpu.dot_dimension_numbers<[1], [0], [0], [1], [0, 0, 1, 1], [], []>} : vector<8x64xf32>, vector<64x256xf32>, vector<8x256xf32> -> vector<8x256xf32>
    %24 = arith.index_cast %18 : i32 to index
    %c0_19 = arith.constant 0 : index
    %25 = vector.load %arg8[%24, %c0_19] : memref<64x256xf32, #tpu.memory_space<vmem>>, vector<8x128xf32>
    %26 = vector.extract_strided_slice %23 {offsets = [0, 0], sizes = [8, 128], strides = [1, 1]} : vector<8x256xf32> to vector<8x128xf32>
    %27 = arith.addf %25, %26 : vector<8x128xf32>
    %28 = arith.index_cast %21 : i32 to index
    %c128 = arith.constant 128 : index
    %29 = vector.load %arg8[%28, %c128] : memref<64x256xf32, #tpu.memory_space<vmem>>, vector<8x128xf32>
    %30 = vector.extract_strided_slice %23 {offsets = [0, 128], sizes = [8, 128], strides = [1, 1]} : vector<8x256xf32> to vector<8x128xf32>
    %31 = arith.addf %29, %30 : vector<8x128xf32>
    %32 = arith.negf %27 : vector<8x128xf32>
    %33 = math.exp %32 : vector<8x128xf32>
    %cst_20 = arith.constant 1.000000e+00 : f32
    %34 = vector.broadcast %cst_20 : f32 to vector<8x128xf32>
    %35 = arith.addf %34, %33 : vector<8x128xf32>
    %36 = arith.divf %34, %35 : vector<8x128xf32>
    %37 = vector.extract_strided_slice %36 {offsets = [0, 0], sizes = [8, 32], strides = [1, 1]} : vector<8x128xf32> to vector<8x32xf32>
    %38 = vector.extract_strided_slice %36 {offsets = [0, 32], sizes = [8, 32], strides = [1, 1]} : vector<8x128xf32> to vector<8x32xf32>
    %39 = vector.extract_strided_slice %36 {offsets = [0, 96], sizes = [8, 32], strides = [1, 1]} : vector<8x128xf32> to vector<8x32xf32>
    %40 = vector.extract_strided_slice %27 {offsets = [0, 64], sizes = [8, 32], strides = [1, 1]} : vector<8x128xf32> to vector<8x32xf32>
    %41 = math.tanh %40 : vector<8x32xf32>
    %42 = arith.mulf %38, %16 : vector<8x32xf32>
    %43 = arith.mulf %37, %41 : vector<8x32xf32>
    %44 = arith.addf %42, %43 : vector<8x32xf32>
    %45 = math.tanh %44 : vector<8x32xf32>
    %46 = arith.mulf %39, %45 : vector<8x32xf32>
    %47 = arith.negf %31 : vector<8x128xf32>
    %48 = math.exp %47 : vector<8x128xf32>
    %cst_21 = arith.constant 1.000000e+00 : f32
    %49 = vector.broadcast %cst_21 : f32 to vector<8x128xf32>
    %50 = arith.addf %49, %48 : vector<8x128xf32>
    %51 = arith.divf %49, %50 : vector<8x128xf32>
    %52 = vector.extract_strided_slice %51 {offsets = [0, 0], sizes = [8, 32], strides = [1, 1]} : vector<8x128xf32> to vector<8x32xf32>
    %53 = vector.extract_strided_slice %51 {offsets = [0, 32], sizes = [8, 32], strides = [1, 1]} : vector<8x128xf32> to vector<8x32xf32>
    %54 = vector.extract_strided_slice %51 {offsets = [0, 96], sizes = [8, 32], strides = [1, 1]} : vector<8x128xf32> to vector<8x32xf32>
    %55 = vector.extract_strided_slice %31 {offsets = [0, 64], sizes = [8, 32], strides = [1, 1]} : vector<8x128xf32> to vector<8x32xf32>
    %56 = math.tanh %55 : vector<8x32xf32>
    %57 = arith.mulf %53, %16 : vector<8x32xf32>
    %58 = arith.mulf %52, %56 : vector<8x32xf32>
    %59 = arith.addf %57, %58 : vector<8x32xf32>
    %60 = math.tanh %59 : vector<8x32xf32>
    %61 = arith.mulf %54, %60 : vector<8x32xf32>
    %c0_22 = arith.constant 0 : index
    %62 = arith.index_cast %18 : i32 to index
    %c0_23 = arith.constant 0 : index
    %63 = vector.load %arg7[%c0_22, %62, %c0_23] : memref<1x64x64xf32, #tpu.memory_space<vmem>>, vector<1x8x32xf32>
    %64 = vector.shape_cast %63 : vector<1x8x32xf32> to vector<8x32xf32>
    %65 = vector.shape_cast %46 : vector<8x32xf32> to vector<1x8x32xf32>
    tpu.vector_store %arg7[%c0_22, %62, %c0_23], %65 {strides = array<i32>} : memref<1x64x64xf32, #tpu.memory_space<vmem>>, vector<1x8x32xf32>,
    %c0_24 = arith.constant 0 : index
    %66 = arith.index_cast %21 : i32 to index
    %c32 = arith.constant 32 : index
    %67 = vector.load %arg7[%c0_24, %66, %c32] : memref<1x64x64xf32, #tpu.memory_space<vmem>>, vector<1x8x32xf32>
    %68 = vector.shape_cast %67 : vector<1x8x32xf32> to vector<8x32xf32>
    %69 = vector.shape_cast %61 : vector<8x32xf32> to vector<1x8x32xf32>
    tpu.vector_store %arg7[%c0_24, %66, %c32], %69 {strides = array<i32>} : memref<1x64x64xf32, #tpu.memory_space<vmem>>, vector<1x8x32xf32>,
    %c1_i32 = arith.constant 1 : i32
    %c8_i32_25 = arith.constant 8 : i32
    %70 = arith.muli %c1_i32, %c8_i32_25 : i32
    %71 = tpu.assume_multiple %70, 8 : i32
    %c7_i32_26 = arith.constant 7 : i32
    %72 = arith.subi %c7_i32_26, %c1_i32 : i32
    %c8_i32_27 = arith.constant 8 : i32
    %73 = arith.muli %72, %c8_i32_27 : i32
    %74 = tpu.assume_multiple %73, 8 : i32
    %75 = tpu.concatenate %46, %61 in 1 : vector<8x32xf32>, vector<8x32xf32> -> vector<8x64xf32>
    %cst_28 = arith.constant dense<0.000000e+00> : vector<8x256xf32>
    %76 = tpu.matmul %75, %15, %cst_28 {dimension_numbers = #tpu.dot_dimension_numbers<[1], [0], [0], [1], [0, 0, 1, 1], [], []>} : vector<8x64xf32>, vector<64x256xf32>, vector<8x256xf32> -> vector<8x256xf32>
    %77 = arith.index_cast %71 : i32 to index
    %c0_29 = arith.constant 0 : index
    %78 = vector.load %arg8[%77, %c0_29] : memref<64x256xf32, #tpu.memory_space<vmem>>, vector<8x128xf32>
    %79 = vector.extract_strided_slice %76 {offsets = [0, 0], sizes = [8, 128], strides = [1, 1]} : vector<8x256xf32> to vector<8x128xf32>
    %80 = arith.addf %78, %79 : vector<8x128xf32>
    %81 = arith.index_cast %74 : i32 to index
    %c128_30 = arith.constant 128 : index
    %82 = vector.load %arg8[%81, %c128_30] : memref<64x256xf32, #tpu.memory_space<vmem>>, vector<8x128xf32>
    %83 = vector.extract_strided_slice %76 {offsets = [0, 128], sizes = [8, 128], strides = [1, 1]} : vector<8x256xf32> to vector<8x128xf32>
    %84 = arith.addf %82, %83 : vector<8x128xf32>
    %85 = arith.negf %80 : vector<8x128xf32>
    %86 = math.exp %85 : vector<8x128xf32>
    %cst_31 = arith.constant 1.000000e+00 : f32
    %87 = vector.broadcast %cst_31 : f32 to vector<8x128xf32>
    %88 = arith.addf %87, %86 : vector<8x128xf32>
    %89 = arith.divf %87, %88 : vector<8x128xf32>
    %90 = vector.extract_strided_slice %89 {offsets = [0, 0], sizes = [8, 32], strides = [1, 1]} : vector<8x128xf32> to vector<8x32xf32>
    %91 = vector.extract_strided_slice %89 {offsets = [0, 32], sizes = [8, 32], strides = [1, 1]} : vector<8x128xf32> to vector<8x32xf32>
    %92 = vector.extract_strided_slice %89 {offsets = [0, 96], sizes = [8, 32], strides = [1, 1]} : vector<8x128xf32> to vector<8x32xf32>
    %93 = vector.extract_strided_slice %80 {offsets = [0, 64], sizes = [8, 32], strides = [1, 1]} : vector<8x128xf32> to vector<8x32xf32>
    %94 = math.tanh %93 : vector<8x32xf32>
    %95 = arith.mulf %91, %44 : vector<8x32xf32>
    %96 = arith.mulf %90, %94 : vector<8x32xf32>
    %97 = arith.addf %95, %96 : vector<8x32xf32>
    %98 = math.tanh %97 : vector<8x32xf32>
    %99 = arith.mulf %92, %98 : vector<8x32xf32>
    %100 = arith.negf %84 : vector<8x128xf32>
    %101 = math.exp %100 : vector<8x128xf32>
    %cst_32 = arith.constant 1.000000e+00 : f32
    %102 = vector.broadcast %cst_32 : f32 to vector<8x128xf32>
    %103 = arith.addf %102, %101 : vector<8x128xf32>
    %104 = arith.divf %102, %103 : vector<8x128xf32>
    %105 = vector.extract_strided_slice %104 {offsets = [0, 0], sizes = [8, 32], strides = [1, 1]} : vector<8x128xf32> to vector<8x32xf32>
    %106 = vector.extract_strided_slice %104 {offsets = [0, 32], sizes = [8, 32], strides = [1, 1]} : vector<8x128xf32> to vector<8x32xf32>
    %107 = vector.extract_strided_slice %104 {offsets = [0, 96], sizes = [8, 32], strides = [1, 1]} : vector<8x128xf32> to vector<8x32xf32>
    %108 = vector.extract_strided_slice %84 {offsets = [0, 64], sizes = [8, 32], strides = [1, 1]} : vector<8x128xf32> to vector<8x32xf32>
    %109 = math.tanh %108 : vector<8x32xf32>
    %110 = arith.mulf %106, %59 : vector<8x32xf32>
    %111 = arith.mulf %105, %109 : vector<8x32xf32>
    %112 = arith.addf %110, %111 : vector<8x32xf32>
    %113 = math.tanh %112 : vector<8x32xf32>
    %114 = arith.mulf %107, %113 : vector<8x32xf32>
    %c0_33 = arith.constant 0 : index
    %115 = arith.index_cast %71 : i32 to index
    %c0_34 = arith.constant 0 : index
    %116 = vector.load %arg7[%c0_33, %115, %c0_34] : memref<1x64x64xf32, #tpu.memory_space<vmem>>, vector<1x8x32xf32>
    %117 = vector.shape_cast %116 : vector<1x8x32xf32> to vector<8x32xf32>
    %118 = vector.shape_cast %99 : vector<8x32xf32> to vector<1x8x32xf32>
    tpu.vector_store %arg7[%c0_33, %115, %c0_34], %118 {strides = array<i32>} : memref<1x64x64xf32, #tpu.memory_space<vmem>>, vector<1x8x32xf32>,
    %c0_35 = arith.constant 0 : index
    %119 = arith.index_cast %74 : i32 to index
    %c32_36 = arith.constant 32 : index
    %120 = vector.load %arg7[%c0_35, %119, %c32_36] : memref<1x64x64xf32, #tpu.memory_space<vmem>>, vector<1x8x32xf32>
    %121 = vector.shape_cast %120 : vector<1x8x32xf32> to vector<8x32xf32>
    %122 = vector.shape_cast %114 : vector<8x32xf32> to vector<1x8x32xf32>
    tpu.vector_store %arg7[%c0_35, %119, %c32_36], %122 {strides = array<i32>} : memref<1x64x64xf32, #tpu.memory_space<vmem>>, vector<1x8x32xf32>,
    %c2_i32 = arith.constant 2 : i32
    %c8_i32_37 = arith.constant 8 : i32
    %123 = arith.muli %c2_i32, %c8_i32_37 : i32
    %124 = tpu.assume_multiple %123, 8 : i32
    %c7_i32_38 = arith.constant 7 : i32
    %125 = arith.subi %c7_i32_38, %c2_i32 : i32
    %c8_i32_39 = arith.constant 8 : i32
    %126 = arith.muli %125, %c8_i32_39 : i32
    %127 = tpu.assume_multiple %126, 8 : i32
    %128 = tpu.concatenate %99, %114 in 1 : vector<8x32xf32>, vector<8x32xf32> -> vector<8x64xf32>
    %cst_40 = arith.constant dense<0.000000e+00> : vector<8x256xf32>
    %129 = tpu.matmul %128, %15, %cst_40 {dimension_numbers = #tpu.dot_dimension_numbers<[1], [0], [0], [1], [0, 0, 1, 1], [], []>} : vector<8x64xf32>, vector<64x256xf32>, vector<8x256xf32> -> vector<8x256xf32>
    %130 = arith.index_cast %124 : i32 to index
    %c0_41 = arith.constant 0 : index
    %131 = vector.load %arg8[%130, %c0_41] : memref<64x256xf32, #tpu.memory_space<vmem>>, vector<8x128xf32>
    %132 = vector.extract_strided_slice %129 {offsets = [0, 0], sizes = [8, 128], strides = [1, 1]} : vector<8x256xf32> to vector<8x128xf32>
    %133 = arith.addf %131, %132 : vector<8x128xf32>
    %134 = arith.index_cast %127 : i32 to index
    %c128_42 = arith.constant 128 : index
    %135 = vector.load %arg8[%134, %c128_42] : memref<64x256xf32, #tpu.memory_space<vmem>>, vector<8x128xf32>
    %136 = vector.extract_strided_slice %129 {offsets = [0, 128], sizes = [8, 128], strides = [1, 1]} : vector<8x256xf32> to vector<8x128xf32>
    %137 = arith.addf %135, %136 : vector<8x128xf32>
    %138 = arith.negf %133 : vector<8x128xf32>
    %139 = math.exp %138 : vector<8x128xf32>
    %cst_43 = arith.constant 1.000000e+00 : f32
    %140 = vector.broadcast %cst_43 : f32 to vector<8x128xf32>
    %141 = arith.addf %140, %139 : vector<8x128xf32>
    %142 = arith.divf %140, %141 : vector<8x128xf32>
    %143 = vector.extract_strided_slice %142 {offsets = [0, 0], sizes = [8, 32], strides = [1, 1]} : vector<8x128xf32> to vector<8x32xf32>
    %144 = vector.extract_strided_slice %142 {offsets = [0, 32], sizes = [8, 32], strides = [1, 1]} : vector<8x128xf32> to vector<8x32xf32>
    %145 = vector.extract_strided_slice %142 {offsets = [0, 96], sizes = [8, 32], strides = [1, 1]} : vector<8x128xf32> to vector<8x32xf32>
    %146 = vector.extract_strided_slice %133 {offsets = [0, 64], sizes = [8, 32], strides = [1, 1]} : vector<8x128xf32> to vector<8x32xf32>
    %147 = math.tanh %146 : vector<8x32xf32>
    %148 = arith.mulf %144, %97 : vector<8x32xf32>
    %149 = arith.mulf %143, %147 : vector<8x32xf32>
    %150 = arith.addf %148, %149 : vector<8x32xf32>
    %151 = math.tanh %150 : vector<8x32xf32>
    %152 = arith.mulf %145, %151 : vector<8x32xf32>
    %153 = arith.negf %137 : vector<8x128xf32>
    %154 = math.exp %153 : vector<8x128xf32>
    %cst_44 = arith.constant 1.000000e+00 : f32
    %155 = vector.broadcast %cst_44 : f32 to vector<8x128xf32>
    %156 = arith.addf %155, %154 : vector<8x128xf32>
    %157 = arith.divf %155, %156 : vector<8x128xf32>
    %158 = vector.extract_strided_slice %157 {offsets = [0, 0], sizes = [8, 32], strides = [1, 1]} : vector<8x128xf32> to vector<8x32xf32>
    %159 = vector.extract_strided_slice %157 {offsets = [0, 32], sizes = [8, 32], strides = [1, 1]} : vector<8x128xf32> to vector<8x32xf32>
    %160 = vector.extract_strided_slice %157 {offsets = [0, 96], sizes = [8, 32], strides = [1, 1]} : vector<8x128xf32> to vector<8x32xf32>
    %161 = vector.extract_strided_slice %137 {offsets = [0, 64], sizes = [8, 32], strides = [1, 1]} : vector<8x128xf32> to vector<8x32xf32>
    %162 = math.tanh %161 : vector<8x32xf32>
    %163 = arith.mulf %159, %112 : vector<8x32xf32>
    %164 = arith.mulf %158, %162 : vector<8x32xf32>
    %165 = arith.addf %163, %164 : vector<8x32xf32>
    %166 = math.tanh %165 : vector<8x32xf32>
    %167 = arith.mulf %160, %166 : vector<8x32xf32>
    %c0_45 = arith.constant 0 : index
    %168 = arith.index_cast %124 : i32 to index
    %c0_46 = arith.constant 0 : index
    %169 = vector.load %arg7[%c0_45, %168, %c0_46] : memref<1x64x64xf32, #tpu.memory_space<vmem>>, vector<1x8x32xf32>
    %170 = vector.shape_cast %169 : vector<1x8x32xf32> to vector<8x32xf32>
    %171 = vector.shape_cast %152 : vector<8x32xf32> to vector<1x8x32xf32>
    tpu.vector_store %arg7[%c0_45, %168, %c0_46], %171 {strides = array<i32>} : memref<1x64x64xf32, #tpu.memory_space<vmem>>, vector<1x8x32xf32>,
    %c0_47 = arith.constant 0 : index
    %172 = arith.index_cast %127 : i32 to index
    %c32_48 = arith.constant 32 : index
    %173 = vector.load %arg7[%c0_47, %172, %c32_48] : memref<1x64x64xf32, #tpu.memory_space<vmem>>, vector<1x8x32xf32>
    %174 = vector.shape_cast %173 : vector<1x8x32xf32> to vector<8x32xf32>
    %175 = vector.shape_cast %167 : vector<8x32xf32> to vector<1x8x32xf32>
    tpu.vector_store %arg7[%c0_47, %172, %c32_48], %175 {strides = array<i32>} : memref<1x64x64xf32, #tpu.memory_space<vmem>>, vector<1x8x32xf32>,
    %c3_i32 = arith.constant 3 : i32
    %c8_i32_49 = arith.constant 8 : i32
    %176 = arith.muli %c3_i32, %c8_i32_49 : i32
    %177 = tpu.assume_multiple %176, 8 : i32
    %c7_i32_50 = arith.constant 7 : i32
    %178 = arith.subi %c7_i32_50, %c3_i32 : i32
    %c8_i32_51 = arith.constant 8 : i32
    %179 = arith.muli %178, %c8_i32_51 : i32
    %180 = tpu.assume_multiple %179, 8 : i32
    %181 = tpu.concatenate %152, %167 in 1 : vector<8x32xf32>, vector<8x32xf32> -> vector<8x64xf32>
    %cst_52 = arith.constant dense<0.000000e+00> : vector<8x256xf32>
    %182 = tpu.matmul %181, %15, %cst_52 {dimension_numbers = #tpu.dot_dimension_numbers<[1], [0], [0], [1], [0, 0, 1, 1], [], []>} : vector<8x64xf32>, vector<64x256xf32>, vector<8x256xf32> -> vector<8x256xf32>
    %183 = arith.index_cast %177 : i32 to index
    %c0_53 = arith.constant 0 : index
    %184 = vector.load %arg8[%183, %c0_53] : memref<64x256xf32, #tpu.memory_space<vmem>>, vector<8x128xf32>
    %185 = vector.extract_strided_slice %182 {offsets = [0, 0], sizes = [8, 128], strides = [1, 1]} : vector<8x256xf32> to vector<8x128xf32>
    %186 = arith.addf %184, %185 : vector<8x128xf32>
    %187 = arith.index_cast %180 : i32 to index
    %c128_54 = arith.constant 128 : index
    %188 = vector.load %arg8[%187, %c128_54] : memref<64x256xf32, #tpu.memory_space<vmem>>, vector<8x128xf32>
    %189 = vector.extract_strided_slice %182 {offsets = [0, 128], sizes = [8, 128], strides = [1, 1]} : vector<8x256xf32> to vector<8x128xf32>
    %190 = arith.addf %188, %189 : vector<8x128xf32>
    %191 = arith.negf %186 : vector<8x128xf32>
    %192 = math.exp %191 : vector<8x128xf32>
    %cst_55 = arith.constant 1.000000e+00 : f32
    %193 = vector.broadcast %cst_55 : f32 to vector<8x128xf32>
    %194 = arith.addf %193, %192 : vector<8x128xf32>
    %195 = arith.divf %193, %194 : vector<8x128xf32>
    %196 = vector.extract_strided_slice %195 {offsets = [0, 0], sizes = [8, 32], strides = [1, 1]} : vector<8x128xf32> to vector<8x32xf32>
    %197 = vector.extract_strided_slice %195 {offsets = [0, 32], sizes = [8, 32], strides = [1, 1]} : vector<8x128xf32> to vector<8x32xf32>
    %198 = vector.extract_strided_slice %195 {offsets = [0, 96], sizes = [8, 32], strides = [1, 1]} : vector<8x128xf32> to vector<8x32xf32>
    %199 = vector.extract_strided_slice %186 {offsets = [0, 64], sizes = [8, 32], strides = [1, 1]} : vector<8x128xf32> to vector<8x32xf32>
    %200 = math.tanh %199 : vector<8x32xf32>
    %201 = arith.mulf %197, %150 : vector<8x32xf32>
    %202 = arith.mulf %196, %200 : vector<8x32xf32>
    %203 = arith.addf %201, %202 : vector<8x32xf32>
    %204 = math.tanh %203 : vector<8x32xf32>
    %205 = arith.mulf %198, %204 : vector<8x32xf32>
    %206 = arith.negf %190 : vector<8x128xf32>
    %207 = math.exp %206 : vector<8x128xf32>
    %cst_56 = arith.constant 1.000000e+00 : f32
    %208 = vector.broadcast %cst_56 : f32 to vector<8x128xf32>
    %209 = arith.addf %208, %207 : vector<8x128xf32>
    %210 = arith.divf %208, %209 : vector<8x128xf32>
    %211 = vector.extract_strided_slice %210 {offsets = [0, 0], sizes = [8, 32], strides = [1, 1]} : vector<8x128xf32> to vector<8x32xf32>
    %212 = vector.extract_strided_slice %210 {offsets = [0, 32], sizes = [8, 32], strides = [1, 1]} : vector<8x128xf32> to vector<8x32xf32>
    %213 = vector.extract_strided_slice %210 {offsets = [0, 96], sizes = [8, 32], strides = [1, 1]} : vector<8x128xf32> to vector<8x32xf32>
    %214 = vector.extract_strided_slice %190 {offsets = [0, 64], sizes = [8, 32], strides = [1, 1]} : vector<8x128xf32> to vector<8x32xf32>
    %215 = math.tanh %214 : vector<8x32xf32>
    %216 = arith.mulf %212, %165 : vector<8x32xf32>
    %217 = arith.mulf %211, %215 : vector<8x32xf32>
    %218 = arith.addf %216, %217 : vector<8x32xf32>
    %219 = math.tanh %218 : vector<8x32xf32>
    %220 = arith.mulf %213, %219 : vector<8x32xf32>
    %c0_57 = arith.constant 0 : index
    %221 = arith.index_cast %177 : i32 to index
    %c0_58 = arith.constant 0 : index
    %222 = vector.load %arg7[%c0_57, %221, %c0_58] : memref<1x64x64xf32, #tpu.memory_space<vmem>>, vector<1x8x32xf32>
    %223 = vector.shape_cast %222 : vector<1x8x32xf32> to vector<8x32xf32>
    %224 = vector.shape_cast %205 : vector<8x32xf32> to vector<1x8x32xf32>
    tpu.vector_store %arg7[%c0_57, %221, %c0_58], %224 {strides = array<i32>} : memref<1x64x64xf32, #tpu.memory_space<vmem>>, vector<1x8x32xf32>,
    %c0_59 = arith.constant 0 : index
    %225 = arith.index_cast %180 : i32 to index
    %c32_60 = arith.constant 32 : index
    %226 = vector.load %arg7[%c0_59, %225, %c32_60] : memref<1x64x64xf32, #tpu.memory_space<vmem>>, vector<1x8x32xf32>
    %227 = vector.shape_cast %226 : vector<1x8x32xf32> to vector<8x32xf32>
    %228 = vector.shape_cast %220 : vector<8x32xf32> to vector<1x8x32xf32>
    tpu.vector_store %arg7[%c0_59, %225, %c32_60], %228 {strides = array<i32>} : memref<1x64x64xf32, #tpu.memory_space<vmem>>, vector<1x8x32xf32>,
    %c4_i32 = arith.constant 4 : i32
    %c8_i32_61 = arith.constant 8 : i32
    %229 = arith.muli %c4_i32, %c8_i32_61 : i32
    %230 = tpu.assume_multiple %229, 8 : i32
    %c7_i32_62 = arith.constant 7 : i32
    %231 = arith.subi %c7_i32_62, %c4_i32 : i32
    %c8_i32_63 = arith.constant 8 : i32
    %232 = arith.muli %231, %c8_i32_63 : i32
    %233 = tpu.assume_multiple %232, 8 : i32
    %234 = tpu.concatenate %205, %220 in 1 : vector<8x32xf32>, vector<8x32xf32> -> vector<8x64xf32>
    %cst_64 = arith.constant dense<0.000000e+00> : vector<8x256xf32>
    %235 = tpu.matmul %234, %15, %cst_64 {dimension_numbers = #tpu.dot_dimension_numbers<[1], [0], [0], [1], [0, 0, 1, 1], [], []>} : vector<8x64xf32>, vector<64x256xf32>, vector<8x256xf32> -> vector<8x256xf32>
    %236 = arith.index_cast %230 : i32 to index
    %c0_65 = arith.constant 0 : index
    %237 = vector.load %arg8[%236, %c0_65] : memref<64x256xf32, #tpu.memory_space<vmem>>, vector<8x128xf32>
    %238 = vector.extract_strided_slice %235 {offsets = [0, 0], sizes = [8, 128], strides = [1, 1]} : vector<8x256xf32> to vector<8x128xf32>
    %239 = arith.addf %237, %238 : vector<8x128xf32>
    %240 = arith.index_cast %233 : i32 to index
    %c128_66 = arith.constant 128 : index
    %241 = vector.load %arg8[%240, %c128_66] : memref<64x256xf32, #tpu.memory_space<vmem>>, vector<8x128xf32>
    %242 = vector.extract_strided_slice %235 {offsets = [0, 128], sizes = [8, 128], strides = [1, 1]} : vector<8x256xf32> to vector<8x128xf32>
    %243 = arith.addf %241, %242 : vector<8x128xf32>
    %244 = arith.negf %239 : vector<8x128xf32>
    %245 = math.exp %244 : vector<8x128xf32>
    %cst_67 = arith.constant 1.000000e+00 : f32
    %246 = vector.broadcast %cst_67 : f32 to vector<8x128xf32>
    %247 = arith.addf %246, %245 : vector<8x128xf32>
    %248 = arith.divf %246, %247 : vector<8x128xf32>
    %249 = vector.extract_strided_slice %248 {offsets = [0, 0], sizes = [8, 32], strides = [1, 1]} : vector<8x128xf32> to vector<8x32xf32>
    %250 = vector.extract_strided_slice %248 {offsets = [0, 32], sizes = [8, 32], strides = [1, 1]} : vector<8x128xf32> to vector<8x32xf32>
    %251 = vector.extract_strided_slice %248 {offsets = [0, 96], sizes = [8, 32], strides = [1, 1]} : vector<8x128xf32> to vector<8x32xf32>
    %252 = vector.extract_strided_slice %239 {offsets = [0, 64], sizes = [8, 32], strides = [1, 1]} : vector<8x128xf32> to vector<8x32xf32>
    %253 = math.tanh %252 : vector<8x32xf32>
    %254 = arith.mulf %250, %203 : vector<8x32xf32>
    %255 = arith.mulf %249, %253 : vector<8x32xf32>
    %256 = arith.addf %254, %255 : vector<8x32xf32>
    %257 = math.tanh %256 : vector<8x32xf32>
    %258 = arith.mulf %251, %257 : vector<8x32xf32>
    %259 = arith.negf %243 : vector<8x128xf32>
    %260 = math.exp %259 : vector<8x128xf32>
    %cst_68 = arith.constant 1.000000e+00 : f32
    %261 = vector.broadcast %cst_68 : f32 to vector<8x128xf32>
    %262 = arith.addf %261, %260 : vector<8x128xf32>
    %263 = arith.divf %261, %262 : vector<8x128xf32>
    %264 = vector.extract_strided_slice %263 {offsets = [0, 0], sizes = [8, 32], strides = [1, 1]} : vector<8x128xf32> to vector<8x32xf32>
    %265 = vector.extract_strided_slice %263 {offsets = [0, 32], sizes = [8, 32], strides = [1, 1]} : vector<8x128xf32> to vector<8x32xf32>
    %266 = vector.extract_strided_slice %263 {offsets = [0, 96], sizes = [8, 32], strides = [1, 1]} : vector<8x128xf32> to vector<8x32xf32>
    %267 = vector.extract_strided_slice %243 {offsets = [0, 64], sizes = [8, 32], strides = [1, 1]} : vector<8x128xf32> to vector<8x32xf32>
    %268 = math.tanh %267 : vector<8x32xf32>
    %269 = arith.mulf %265, %218 : vector<8x32xf32>
    %270 = arith.mulf %264, %268 : vector<8x32xf32>
    %271 = arith.addf %269, %270 : vector<8x32xf32>
    %272 = math.tanh %271 : vector<8x32xf32>
    %273 = arith.mulf %266, %272 : vector<8x32xf32>
    %c0_69 = arith.constant 0 : index
    %274 = arith.index_cast %230 : i32 to index
    %c0_70 = arith.constant 0 : index
    %275 = vector.load %arg7[%c0_69, %274, %c0_70] : memref<1x64x64xf32, #tpu.memory_space<vmem>>, vector<1x8x32xf32>
    %276 = vector.shape_cast %275 : vector<1x8x32xf32> to vector<8x32xf32>
    %277 = vector.shape_cast %258 : vector<8x32xf32> to vector<1x8x32xf32>
    tpu.vector_store %arg7[%c0_69, %274, %c0_70], %277 {strides = array<i32>} : memref<1x64x64xf32, #tpu.memory_space<vmem>>, vector<1x8x32xf32>,
    %c0_71 = arith.constant 0 : index
    %278 = arith.index_cast %233 : i32 to index
    %c32_72 = arith.constant 32 : index
    %279 = vector.load %arg7[%c0_71, %278, %c32_72] : memref<1x64x64xf32, #tpu.memory_space<vmem>>, vector<1x8x32xf32>
    %280 = vector.shape_cast %279 : vector<1x8x32xf32> to vector<8x32xf32>
    %281 = vector.shape_cast %273 : vector<8x32xf32> to vector<1x8x32xf32>
    tpu.vector_store %arg7[%c0_71, %278, %c32_72], %281 {strides = array<i32>} : memref<1x64x64xf32, #tpu.memory_space<vmem>>, vector<1x8x32xf32>,
    %c5_i32 = arith.constant 5 : i32
    %c8_i32_73 = arith.constant 8 : i32
    %282 = arith.muli %c5_i32, %c8_i32_73 : i32
    %283 = tpu.assume_multiple %282, 8 : i32
    %c7_i32_74 = arith.constant 7 : i32
    %284 = arith.subi %c7_i32_74, %c5_i32 : i32
    %c8_i32_75 = arith.constant 8 : i32
    %285 = arith.muli %284, %c8_i32_75 : i32
    %286 = tpu.assume_multiple %285, 8 : i32
    %287 = tpu.concatenate %258, %273 in 1 : vector<8x32xf32>, vector<8x32xf32> -> vector<8x64xf32>
    %cst_76 = arith.constant dense<0.000000e+00> : vector<8x256xf32>
    %288 = tpu.matmul %287, %15, %cst_76 {dimension_numbers = #tpu.dot_dimension_numbers<[1], [0], [0], [1], [0, 0, 1, 1], [], []>} : vector<8x64xf32>, vector<64x256xf32>, vector<8x256xf32> -> vector<8x256xf32>
    %289 = arith.index_cast %283 : i32 to index
    %c0_77 = arith.constant 0 : index
    %290 = vector.load %arg8[%289, %c0_77] : memref<64x256xf32, #tpu.memory_space<vmem>>, vector<8x128xf32>
    %291 = vector.extract_strided_slice %288 {offsets = [0, 0], sizes = [8, 128], strides = [1, 1]} : vector<8x256xf32> to vector<8x128xf32>
    %292 = arith.addf %290, %291 : vector<8x128xf32>
    %293 = arith.index_cast %286 : i32 to index
    %c128_78 = arith.constant 128 : index
    %294 = vector.load %arg8[%293, %c128_78] : memref<64x256xf32, #tpu.memory_space<vmem>>, vector<8x128xf32>
    %295 = vector.extract_strided_slice %288 {offsets = [0, 128], sizes = [8, 128], strides = [1, 1]} : vector<8x256xf32> to vector<8x128xf32>
    %296 = arith.addf %294, %295 : vector<8x128xf32>
    %297 = arith.negf %292 : vector<8x128xf32>
    %298 = math.exp %297 : vector<8x128xf32>
    %cst_79 = arith.constant 1.000000e+00 : f32
    %299 = vector.broadcast %cst_79 : f32 to vector<8x128xf32>
    %300 = arith.addf %299, %298 : vector<8x128xf32>
    %301 = arith.divf %299, %300 : vector<8x128xf32>
    %302 = vector.extract_strided_slice %301 {offsets = [0, 0], sizes = [8, 32], strides = [1, 1]} : vector<8x128xf32> to vector<8x32xf32>
    %303 = vector.extract_strided_slice %301 {offsets = [0, 32], sizes = [8, 32], strides = [1, 1]} : vector<8x128xf32> to vector<8x32xf32>
    %304 = vector.extract_strided_slice %301 {offsets = [0, 96], sizes = [8, 32], strides = [1, 1]} : vector<8x128xf32> to vector<8x32xf32>
    %305 = vector.extract_strided_slice %292 {offsets = [0, 64], sizes = [8, 32], strides = [1, 1]} : vector<8x128xf32> to vector<8x32xf32>
    %306 = math.tanh %305 : vector<8x32xf32>
    %307 = arith.mulf %303, %256 : vector<8x32xf32>
    %308 = arith.mulf %302, %306 : vector<8x32xf32>
    %309 = arith.addf %307, %308 : vector<8x32xf32>
    %310 = math.tanh %309 : vector<8x32xf32>
    %311 = arith.mulf %304, %310 : vector<8x32xf32>
    %312 = arith.negf %296 : vector<8x128xf32>
    %313 = math.exp %312 : vector<8x128xf32>
    %cst_80 = arith.constant 1.000000e+00 : f32
    %314 = vector.broadcast %cst_80 : f32 to vector<8x128xf32>
    %315 = arith.addf %314, %313 : vector<8x128xf32>
    %316 = arith.divf %314, %315 : vector<8x128xf32>
    %317 = vector.extract_strided_slice %316 {offsets = [0, 0], sizes = [8, 32], strides = [1, 1]} : vector<8x128xf32> to vector<8x32xf32>
    %318 = vector.extract_strided_slice %316 {offsets = [0, 32], sizes = [8, 32], strides = [1, 1]} : vector<8x128xf32> to vector<8x32xf32>
    %319 = vector.extract_strided_slice %316 {offsets = [0, 96], sizes = [8, 32], strides = [1, 1]} : vector<8x128xf32> to vector<8x32xf32>
    %320 = vector.extract_strided_slice %296 {offsets = [0, 64], sizes = [8, 32], strides = [1, 1]} : vector<8x128xf32> to vector<8x32xf32>
    %321 = math.tanh %320 : vector<8x32xf32>
    %322 = arith.mulf %318, %271 : vector<8x32xf32>
    %323 = arith.mulf %317, %321 : vector<8x32xf32>
    %324 = arith.addf %322, %323 : vector<8x32xf32>
    %325 = math.tanh %324 : vector<8x32xf32>
    %326 = arith.mulf %319, %325 : vector<8x32xf32>
    %c0_81 = arith.constant 0 : index
    %327 = arith.index_cast %283 : i32 to index
    %c0_82 = arith.constant 0 : index
    %328 = vector.load %arg7[%c0_81, %327, %c0_82] : memref<1x64x64xf32, #tpu.memory_space<vmem>>, vector<1x8x32xf32>
    %329 = vector.shape_cast %328 : vector<1x8x32xf32> to vector<8x32xf32>
    %330 = vector.shape_cast %311 : vector<8x32xf32> to vector<1x8x32xf32>
    tpu.vector_store %arg7[%c0_81, %327, %c0_82], %330 {strides = array<i32>} : memref<1x64x64xf32, #tpu.memory_space<vmem>>, vector<1x8x32xf32>,
    %c0_83 = arith.constant 0 : index
    %331 = arith.index_cast %286 : i32 to index
    %c32_84 = arith.constant 32 : index
    %332 = vector.load %arg7[%c0_83, %331, %c32_84] : memref<1x64x64xf32, #tpu.memory_space<vmem>>, vector<1x8x32xf32>
    %333 = vector.shape_cast %332 : vector<1x8x32xf32> to vector<8x32xf32>
    %334 = vector.shape_cast %326 : vector<8x32xf32> to vector<1x8x32xf32>
    tpu.vector_store %arg7[%c0_83, %331, %c32_84], %334 {strides = array<i32>} : memref<1x64x64xf32, #tpu.memory_space<vmem>>, vector<1x8x32xf32>,
    %c6_i32 = arith.constant 6 : i32
    %c8_i32_85 = arith.constant 8 : i32
    %335 = arith.muli %c6_i32, %c8_i32_85 : i32
    %336 = tpu.assume_multiple %335, 8 : i32
    %c7_i32_86 = arith.constant 7 : i32
    %337 = arith.subi %c7_i32_86, %c6_i32 : i32
    %c8_i32_87 = arith.constant 8 : i32
    %338 = arith.muli %337, %c8_i32_87 : i32
    %339 = tpu.assume_multiple %338, 8 : i32
    %340 = tpu.concatenate %311, %326 in 1 : vector<8x32xf32>, vector<8x32xf32> -> vector<8x64xf32>
    %cst_88 = arith.constant dense<0.000000e+00> : vector<8x256xf32>
    %341 = tpu.matmul %340, %15, %cst_88 {dimension_numbers = #tpu.dot_dimension_numbers<[1], [0], [0], [1], [0, 0, 1, 1], [], []>} : vector<8x64xf32>, vector<64x256xf32>, vector<8x256xf32> -> vector<8x256xf32>
    %342 = arith.index_cast %336 : i32 to index
    %c0_89 = arith.constant 0 : index
    %343 = vector.load %arg8[%342, %c0_89] : memref<64x256xf32, #tpu.memory_space<vmem>>, vector<8x128xf32>
    %344 = vector.extract_strided_slice %341 {offsets = [0, 0], sizes = [8, 128], strides = [1, 1]} : vector<8x256xf32> to vector<8x128xf32>
    %345 = arith.addf %343, %344 : vector<8x128xf32>
    %346 = arith.index_cast %339 : i32 to index
    %c128_90 = arith.constant 128 : index
    %347 = vector.load %arg8[%346, %c128_90] : memref<64x256xf32, #tpu.memory_space<vmem>>, vector<8x128xf32>
    %348 = vector.extract_strided_slice %341 {offsets = [0, 128], sizes = [8, 128], strides = [1, 1]} : vector<8x256xf32> to vector<8x128xf32>
    %349 = arith.addf %347, %348 : vector<8x128xf32>
    %350 = arith.negf %345 : vector<8x128xf32>
    %351 = math.exp %350 : vector<8x128xf32>
    %cst_91 = arith.constant 1.000000e+00 : f32
    %352 = vector.broadcast %cst_91 : f32 to vector<8x128xf32>
    %353 = arith.addf %352, %351 : vector<8x128xf32>
    %354 = arith.divf %352, %353 : vector<8x128xf32>
    %355 = vector.extract_strided_slice %354 {offsets = [0, 0], sizes = [8, 32], strides = [1, 1]} : vector<8x128xf32> to vector<8x32xf32>
    %356 = vector.extract_strided_slice %354 {offsets = [0, 32], sizes = [8, 32], strides = [1, 1]} : vector<8x128xf32> to vector<8x32xf32>
    %357 = vector.extract_strided_slice %354 {offsets = [0, 96], sizes = [8, 32], strides = [1, 1]} : vector<8x128xf32> to vector<8x32xf32>
    %358 = vector.extract_strided_slice %345 {offsets = [0, 64], sizes = [8, 32], strides = [1, 1]} : vector<8x128xf32> to vector<8x32xf32>
    %359 = math.tanh %358 : vector<8x32xf32>
    %360 = arith.mulf %356, %309 : vector<8x32xf32>
    %361 = arith.mulf %355, %359 : vector<8x32xf32>
    %362 = arith.addf %360, %361 : vector<8x32xf32>
    %363 = math.tanh %362 : vector<8x32xf32>
    %364 = arith.mulf %357, %363 : vector<8x32xf32>
    %365 = arith.negf %349 : vector<8x128xf32>
    %366 = math.exp %365 : vector<8x128xf32>
    %cst_92 = arith.constant 1.000000e+00 : f32
    %367 = vector.broadcast %cst_92 : f32 to vector<8x128xf32>
    %368 = arith.addf %367, %366 : vector<8x128xf32>
    %369 = arith.divf %367, %368 : vector<8x128xf32>
    %370 = vector.extract_strided_slice %369 {offsets = [0, 0], sizes = [8, 32], strides = [1, 1]} : vector<8x128xf32> to vector<8x32xf32>
    %371 = vector.extract_strided_slice %369 {offsets = [0, 32], sizes = [8, 32], strides = [1, 1]} : vector<8x128xf32> to vector<8x32xf32>
    %372 = vector.extract_strided_slice %369 {offsets = [0, 96], sizes = [8, 32], strides = [1, 1]} : vector<8x128xf32> to vector<8x32xf32>
    %373 = vector.extract_strided_slice %349 {offsets = [0, 64], sizes = [8, 32], strides = [1, 1]} : vector<8x128xf32> to vector<8x32xf32>
    %374 = math.tanh %373 : vector<8x32xf32>
    %375 = arith.mulf %371, %324 : vector<8x32xf32>
    %376 = arith.mulf %370, %374 : vector<8x32xf32>
    %377 = arith.addf %375, %376 : vector<8x32xf32>
    %378 = math.tanh %377 : vector<8x32xf32>
    %379 = arith.mulf %372, %378 : vector<8x32xf32>
    %c0_93 = arith.constant 0 : index
    %380 = arith.index_cast %336 : i32 to index
    %c0_94 = arith.constant 0 : index
    %381 = vector.load %arg7[%c0_93, %380, %c0_94] : memref<1x64x64xf32, #tpu.memory_space<vmem>>, vector<1x8x32xf32>
    %382 = vector.shape_cast %381 : vector<1x8x32xf32> to vector<8x32xf32>
    %383 = vector.shape_cast %364 : vector<8x32xf32> to vector<1x8x32xf32>
    tpu.vector_store %arg7[%c0_93, %380, %c0_94], %383 {strides = array<i32>} : memref<1x64x64xf32, #tpu.memory_space<vmem>>, vector<1x8x32xf32>,
    %c0_95 = arith.constant 0 : index
    %384 = arith.index_cast %339 : i32 to index
    %c32_96 = arith.constant 32 : index
    %385 = vector.load %arg7[%c0_95, %384, %c32_96] : memref<1x64x64xf32, #tpu.memory_space<vmem>>, vector<1x8x32xf32>
    %386 = vector.shape_cast %385 : vector<1x8x32xf32> to vector<8x32xf32>
    %387 = vector.shape_cast %379 : vector<8x32xf32> to vector<1x8x32xf32>
    tpu.vector_store %arg7[%c0_95, %384, %c32_96], %387 {strides = array<i32>} : memref<1x64x64xf32, #tpu.memory_space<vmem>>, vector<1x8x32xf32>,
    %c7_i32_97 = arith.constant 7 : i32
    %c8_i32_98 = arith.constant 8 : i32
    %388 = arith.muli %c7_i32_97, %c8_i32_98 : i32
    %389 = tpu.assume_multiple %388, 8 : i32
    %c7_i32_99 = arith.constant 7 : i32
    %390 = arith.subi %c7_i32_99, %c7_i32_97 : i32
    %c8_i32_100 = arith.constant 8 : i32
    %391 = arith.muli %390, %c8_i32_100 : i32
    %392 = tpu.assume_multiple %391, 8 : i32
    %393 = tpu.concatenate %364, %379 in 1 : vector<8x32xf32>, vector<8x32xf32> -> vector<8x64xf32>
    %cst_101 = arith.constant dense<0.000000e+00> : vector<8x256xf32>
    %394 = tpu.matmul %393, %15, %cst_101 {dimension_numbers = #tpu.dot_dimension_numbers<[1], [0], [0], [1], [0, 0, 1, 1], [], []>} : vector<8x64xf32>, vector<64x256xf32>, vector<8x256xf32> -> vector<8x256xf32>
    %395 = arith.index_cast %389 : i32 to index
    %c0_102 = arith.constant 0 : index
    %396 = vector.load %arg8[%395, %c0_102] : memref<64x256xf32, #tpu.memory_space<vmem>>, vector<8x128xf32>
    %397 = vector.extract_strided_slice %394 {offsets = [0, 0], sizes = [8, 128], strides = [1, 1]} : vector<8x256xf32> to vector<8x128xf32>
    %398 = arith.addf %396, %397 : vector<8x128xf32>
    %399 = arith.index_cast %392 : i32 to index
    %c128_103 = arith.constant 128 : index
    %400 = vector.load %arg8[%399, %c128_103] : memref<64x256xf32, #tpu.memory_space<vmem>>, vector<8x128xf32>
    %401 = vector.extract_strided_slice %394 {offsets = [0, 128], sizes = [8, 128], strides = [1, 1]} : vector<8x256xf32> to vector<8x128xf32>
    %402 = arith.addf %400, %401 : vector<8x128xf32>
    %403 = arith.negf %398 : vector<8x128xf32>
    %404 = math.exp %403 : vector<8x128xf32>
    %cst_104 = arith.constant 1.000000e+00 : f32
    %405 = vector.broadcast %cst_104 : f32 to vector<8x128xf32>
    %406 = arith.addf %405, %404 : vector<8x128xf32>
    %407 = arith.divf %405, %406 : vector<8x128xf32>
    %408 = vector.extract_strided_slice %407 {offsets = [0, 0], sizes = [8, 32], strides = [1, 1]} : vector<8x128xf32> to vector<8x32xf32>
    %409 = vector.extract_strided_slice %407 {offsets = [0, 32], sizes = [8, 32], strides = [1, 1]} : vector<8x128xf32> to vector<8x32xf32>
    %410 = vector.extract_strided_slice %407 {offsets = [0, 96], sizes = [8, 32], strides = [1, 1]} : vector<8x128xf32> to vector<8x32xf32>
    %411 = vector.extract_strided_slice %398 {offsets = [0, 64], sizes = [8, 32], strides = [1, 1]} : vector<8x128xf32> to vector<8x32xf32>
    %412 = math.tanh %411 : vector<8x32xf32>
    %413 = arith.mulf %409, %362 : vector<8x32xf32>
    %414 = arith.mulf %408, %412 : vector<8x32xf32>
    %415 = arith.addf %413, %414 : vector<8x32xf32>
    %416 = math.tanh %415 : vector<8x32xf32>
    %417 = arith.mulf %410, %416 : vector<8x32xf32>
    %418 = arith.negf %402 : vector<8x128xf32>
    %419 = math.exp %418 : vector<8x128xf32>
    %cst_105 = arith.constant 1.000000e+00 : f32
    %420 = vector.broadcast %cst_105 : f32 to vector<8x128xf32>
    %421 = arith.addf %420, %419 : vector<8x128xf32>
    %422 = arith.divf %420, %421 : vector<8x128xf32>
    %423 = vector.extract_strided_slice %422 {offsets = [0, 0], sizes = [8, 32], strides = [1, 1]} : vector<8x128xf32> to vector<8x32xf32>
    %424 = vector.extract_strided_slice %422 {offsets = [0, 32], sizes = [8, 32], strides = [1, 1]} : vector<8x128xf32> to vector<8x32xf32>
    %425 = vector.extract_strided_slice %422 {offsets = [0, 96], sizes = [8, 32], strides = [1, 1]} : vector<8x128xf32> to vector<8x32xf32>
    %426 = vector.extract_strided_slice %402 {offsets = [0, 64], sizes = [8, 32], strides = [1, 1]} : vector<8x128xf32> to vector<8x32xf32>
    %427 = math.tanh %426 : vector<8x32xf32>
    %428 = arith.mulf %424, %377 : vector<8x32xf32>
    %429 = arith.mulf %423, %427 : vector<8x32xf32>
    %430 = arith.addf %428, %429 : vector<8x32xf32>
    %431 = math.tanh %430 : vector<8x32xf32>
    %432 = arith.mulf %425, %431 : vector<8x32xf32>
    %c0_106 = arith.constant 0 : index
    %433 = arith.index_cast %389 : i32 to index
    %c0_107 = arith.constant 0 : index
    %434 = vector.load %arg7[%c0_106, %433, %c0_107] : memref<1x64x64xf32, #tpu.memory_space<vmem>>, vector<1x8x32xf32>
    %435 = vector.shape_cast %434 : vector<1x8x32xf32> to vector<8x32xf32>
    %436 = vector.shape_cast %417 : vector<8x32xf32> to vector<1x8x32xf32>
    tpu.vector_store %arg7[%c0_106, %433, %c0_107], %436 {strides = array<i32>} : memref<1x64x64xf32, #tpu.memory_space<vmem>>, vector<1x8x32xf32>,
    %c0_108 = arith.constant 0 : index
    %437 = arith.index_cast %392 : i32 to index
    %c32_109 = arith.constant 32 : index
    %438 = vector.load %arg7[%c0_108, %437, %c32_109] : memref<1x64x64xf32, #tpu.memory_space<vmem>>, vector<1x8x32xf32>
    %439 = vector.shape_cast %438 : vector<1x8x32xf32> to vector<8x32xf32>
    %440 = vector.shape_cast %432 : vector<8x32xf32> to vector<1x8x32xf32>
    tpu.vector_store %arg7[%c0_108, %437, %c32_109], %440 {strides = array<i32>} : memref<1x64x64xf32, #tpu.memory_space<vmem>>, vector<1x8x32xf32>,
    %c8_i32_110 = arith.constant 8 : i32
    return
  }
  func.func @transform_0(%arg0: i32) -> (i32, i32, i32) {
    %c0_i32 = arith.constant 0 : i32
    %c0_i32_0 = arith.constant 0 : i32
    %c0_i32_1 = arith.constant 0 : i32
    return %arg0, %c0_i32, %c0_i32_0 : i32, i32, i32
  }
  func.func @transform_1(%arg0: i32) -> (i32, i32) {
    %c0_i32 = arith.constant 0 : i32
    %c0_i32_0 = arith.constant 0 : i32
    %c0_i32_1 = arith.constant 0 : i32
    return %c0_i32, %c0_i32_0 : i32, i32
  }
  func.func @transform_2(%arg0: i32) -> (i32, i32) {
    %c0_i32 = arith.constant 0 : i32
    %c0_i32_0 = arith.constant 0 : i32
    %c0_i32_1 = arith.constant 0 : i32
    return %c0_i32, %c0_i32_0 : i32, i32
  }
  func.func @transform_3(%arg0: i32) -> (i32, i32) {
    %c0_i32 = arith.constant 0 : i32
    %c0_i32_0 = arith.constant 0 : i32
    %c0_i32_1 = arith.constant 0 : i32
    return %c0_i32, %c0_i32_0 : i32, i32
  }
  func.func @transform_4(%arg0: i32) -> (i32, i32) {
    %c0_i32 = arith.constant 0 : i32
    %c0_i32_0 = arith.constant 0 : i32
    %c0_i32_1 = arith.constant 0 : i32
    return %c0_i32, %c0_i32_0 : i32, i32
  }
  func.func @transform_5(%arg0: i32) -> (i32, i32) {
    %c0_i32 = arith.constant 0 : i32
    %c0_i32_0 = arith.constant 0 : i32
    %c0_i32_1 = arith.constant 0 : i32
    return %c0_i32, %c0_i32_0 : i32, i32
  }
  func.func @transform_6(%arg0: i32) -> (i32, i32, i32) {
    %c0_i32 = arith.constant 0 : i32
    %c0_i32_0 = arith.constant 0 : i32
    %c0_i32_1 = arith.constant 0 : i32
    return %arg0, %c0_i32, %c0_i32_0 : i32, i32, i32
  }
}

</mosaic_0001>

<llo_original>
// kernel: temporal_forward.1
$region0: #{temporal_forward.1}
  #allocation0 [shape = 'u32[]', space=smem, size = 0x4, offset = 0x4, fixed_abs, tag = 'smem constant byte address 0x4 - core index']
  #allocation1 [shape = 'u32[144,128]{1,0:T(1,128)}', space=vmem, size = 0x12000, scoped, tag = 'internal scratch']
  #allocation2 [shape = 'f32[64,256]{1,0:T(8,128)}', space=vmem, size = 0x10000, scoped, tag = 'scratch operand']
  %s0 = inlined_call_operand.vmem [shape: f32[1,64,12], index: 0, kind: input, shape index: {}]
  %s1 = inlined_call_operand.vmem [shape: f32[12,32], index: 1, kind: input, shape index: {}]
  %s2 = inlined_call_operand.vmem [shape: f32[1,32], index: 2, kind: input, shape index: {}]
  %s3 = inlined_call_operand.vmem [shape: f32[32,256], index: 3, kind: input, shape index: {}]
  %s4 = inlined_call_operand.vmem [shape: f32[1,256], index: 4, kind: input, shape index: {}]
  %s5 = inlined_call_operand.vmem [shape: f32[64,256], index: 5, kind: input, shape index: {}]
  %s6 = inlined_call_operand.vmem [shape: f32[1,64,64], index: 6, kind: output, shape index: {}]
  %s7 = sld [smem:[#allocation0]]
  $region34: #{temporal_forward.1} parent=0
    _
  %s9 = ssub.s32 1, %s7
  %s10 = scalar_select 0, %s9, %s7
  // Predicated region
  $region2: #{temporal_forward.1} parent=0 // pred_check
    _
  $region3: #{temporal_forward.1} parent=0 // pred_check_branch
    %12 = sbr.rel (0) target = $region5
  $region4: #{temporal_forward.1} parent=0 // pred_region
    _
  $region5: #{temporal_forward.1} parent=0 // pred_fallthru
    _
  // Predicated region
  $region6: #{temporal_forward.1} parent=0 // pred_check
    _
  $region7: #{temporal_forward.1} parent=0 // pred_check_branch
    %14 = sbr.rel (0) target = $region9
  $region8: #{temporal_forward.1} parent=0 // pred_region
    _
  $region9: #{temporal_forward.1} parent=0 // pred_fallthru
    _
  // Predicated region
  $region10: #{temporal_forward.1} parent=0 // pred_check
    _
  $region11: #{temporal_forward.1} parent=0 // pred_check_branch
    %16 = sbr.rel (0) target = $region13
  $region12: #{temporal_forward.1} parent=0 // pred_region
    _
  $region13: #{temporal_forward.1} parent=0 // pred_fallthru
    _
  // Predicated region
  $region14: #{temporal_forward.1} parent=0 // pred_check
    _
  $region15: #{temporal_forward.1} parent=0 // pred_check_branch
    %18 = sbr.rel (0) target = $region17
  $region16: #{temporal_forward.1} parent=0 // pred_region
    _
  $region17: #{temporal_forward.1} parent=0 // pred_fallthru
    _
  // Predicated region
  $region18: #{temporal_forward.1} parent=0 // pred_check
    _
  $region19: #{temporal_forward.1} parent=0 // pred_check_branch
    %20 = sbr.rel (0) target = $region21
  $region20: #{temporal_forward.1} parent=0 // pred_region
    _
  $region21: #{temporal_forward.1} parent=0 // pred_fallthru
    _
  // Predicated region
  $region22: #{temporal_forward.1} parent=0 // pred_check
    _
  $region23: #{temporal_forward.1} parent=0 // pred_check_branch
    %22 = sbr.rel (0) target = $region25
  $region24: #{temporal_forward.1} parent=0 // pred_region
    _
  $region25: #{temporal_forward.1} parent=0 // pred_fallthru
    _
  %v23 = vld [vmem:[%s0] sm:$0xff]
  %v24 = vld [vmem:[%s0 + $0x8] sm:$0xff]
  %v25 = vld [vmem:[%s0 + $0x10] sm:$0xff]
  %v26 = vld [vmem:[%s0 + $0x18] sm:$0xff]
  %v27 = vld [vmem:[%s0 + $0x20] sm:$0xff]
  %v28 = vld [vmem:[%s0 + $0x28] sm:$0xff]
  %v29 = vld [vmem:[%s0 + $0x30] sm:$0xff]
  %v30 = vld [vmem:[%s0 + $0x38] sm:$0xff]
  %v31 = vld [vmem:[%s1] sm:$0xff]
  %v32 = vld [vmem:[%s1 + $0x8] sm:$0xf]
  %v33 = vld [vmem:[%s2] sm:$0x1]
  %v35 = vlaneseq
  %v36 = vshrl.u32 %v35, 7
  %v37 = vsub.s32 0, %v36
  %v38 = vrot.slane %v33, %v37
  %vm40 = vcmask 97280
  %v42 = vsel %vm40, %v23, 0
  %v45 = vsel %vm40, %v24, 0
  %v48 = vsel %vm40, %v25, 0
  %v51 = vsel %vm40, %v26, 0
  %v54 = vsel %vm40, %v27, 0
  %v57 = vsel %vm40, %v28, 0
  %v60 = vsel %vm40, %v29, 0
  %v63 = vsel %vm40, %v30, 0
  %vm65 = vcmask 1043456
  %v67 = vsel %vm65, %v32, 0
  %69 = vmatprep.subr.mxu0 0.0
  %70 = vmatpush1.msra.mxu0 %v31
  %71 = vmatprep.subr.mxu0 0.0
  %72 = vmatpush1.msra.mxu0 %v67
  %73 = vmatprep.subr.mxu0 0.0
  %74 = vmatpush1.msra.mxu0 0.0
  %75 = vmatprep.subr.mxu0 0.0
  %76 = vmatpush1.msra.mxu0 0.0
  %77 = vmatprep.subr.mxu0 0.0
  %78 = vmatpush1.msra.mxu0 0.0
  %79 = vmatprep.subr.mxu0 0.0
  %80 = vmatpush1.msra.mxu0 0.0
  %81 = vmatprep.subr.mxu0 0.0
  %82 = vmatpush1.msra.mxu0 0.0
  %83 = vmatprep.subr.mxu0 0.0
  %84 = vmatpush1.msra.mxu0 0.0
  %85 = vmatprep.subr.mxu0 0.0
  %86 = vmatpush1.msra.mxu0 0.0
  %87 = vmatprep.subr.mxu0 0.0
  %88 = vmatpush1.msra.mxu0 0.0
  %89 = vmatprep.subr.mxu0 0.0
  %90 = vmatpush1.msra.mxu0 0.0
  %91 = vmatprep.subr.mxu0 0.0
  %92 = vmatpush1.msra.mxu0 0.0
  %93 = vmatprep.subr.mxu0 0.0
  %94 = vmatpush1.msra.mxu0 0.0
  %95 = vmatprep.subr.mxu0 0.0
  %96 = vmatpush1.msra.mxu0 0.0
  %97 = vmatprep.subr.mxu0 0.0
  %98 = vmatpush1.msra.mxu0 0.0
  %99 = vmatprep.subr.mxu0 0.0
  %100 = vmatpush1.msra.mxu0 0.0
  %101 = vmatprep.subr.mxu0 0.0
  %102 = vmatpush1.msra.mxu0 0.0
  %103 = vmatprep.subr.mxu0 0.0
  %104 = vmatpush1.msra.mxu0 0.0
  %105 = vmatprep.subr.mxu0 0.0
  %106 = vmatpush1.msra.mxu0 0.0
  %107 = vmatprep.subr.mxu0 0.0
  %108 = vmatpush1.msra.mxu0 0.0
  %109 = vmatprep.subr.mxu0 0.0
  %110 = vmatpush1.msra.mxu0 0.0
  %111 = vmatprep.subr.mxu0 0.0
  %112 = vmatpush1.msra.mxu0 0.0
  %113 = vmatprep.subr.mxu0 0.0
  %114 = vmatpush1.msra.mxu0 0.0
  %115 = vmatprep.subr.mxu0 0.0
  %116 = vmatpush1.msra.mxu0 0.0
  %117 = vmatprep.subr.mxu0 0.0
  %118 = vmatpush1.msra.mxu0 0.0
  %119 = vmatprep.subr.mxu0 0.0
  %120 = vmatpush1.msra.mxu0 0.0
  %121 = vmatprep.subr.mxu0 0.0
  %122 = vmatpush1.msra.mxu0 0.0
  %123 = vmatprep.subr.mxu0 0.0
  %124 = vmatpush1.msra.mxu0 0.0
  %125 = vmatprep.subr.mxu0 0.0
  %126 = vmatpush1.msra.mxu0 0.0
  %127 = vmatprep.subr.mxu0 0.0
  %128 = vmatpush1.msra.mxu0 0.0
  %129 = vmatprep.subr.mxu0 0.0
  %130 = vmatpush1.msra.mxu0 0.0
  %131 = vmatprep.subr.mxu0 0.0
  %132 = vmatpush1.msra.mxu0 0.0
  %133 = vmatprep.mubr.f32.mxu0 0.0
  %134 = vmatmul.mubr.f32.gmra.mrb[0].mxu0 %v42
  %v135 = vpop.f32.mrb[0].mxu0
  %v136 = vadd.f32 %v38, %v135
  %v137 = vpop.f32.mrb[0].mxu0
  %138 = vmatprep.mubr.f32.mxu0 0.0
  %139 = vmatmul.mubr.f32.gmra.mrb[0].mxu0 %v45
  %v140 = vpop.f32.mrb[0].mxu0
  %v141 = vadd.f32 %v38, %v140
  %v142 = vpop.f32.mrb[0].mxu0
  %143 = vmatprep.mubr.f32.mxu0 0.0
  %144 = vmatmul.mubr.f32.gmra.mrb[0].mxu0 %v48
  %v145 = vpop.f32.mrb[0].mxu0
  %v146 = vadd.f32 %v38, %v145
  %v147 = vpop.f32.mrb[0].mxu0
  %148 = vmatprep.mubr.f32.mxu0 0.0
  %149 = vmatmul.mubr.f32.gmra.mrb[0].mxu0 %v51
  %v150 = vpop.f32.mrb[0].mxu0
  %v151 = vadd.f32 %v38, %v150
  %v152 = vpop.f32.mrb[0].mxu0
  %153 = vmatprep.mubr.f32.mxu0 0.0
  %154 = vmatmul.mubr.f32.gmra.mrb[0].mxu0 %v54
  %v155 = vpop.f32.mrb[0].mxu0
  %v156 = vadd.f32 %v38, %v155
  %v157 = vpop.f32.mrb[0].mxu0
  %158 = vmatprep.mubr.f32.mxu0 0.0
  %159 = vmatmul.mubr.f32.gmra.mrb[0].mxu0 %v57
  %v160 = vpop.f32.mrb[0].mxu0
  %v161 = vadd.f32 %v38, %v160
  %v162 = vpop.f32.mrb[0].mxu0
  %163 = vmatprep.mubr.f32.mxu0 0.0
  %164 = vmatmul.mubr.f32.gmra.mrb[0].mxu0 %v60
  %v165 = vpop.f32.mrb[0].mxu0
  %v166 = vadd.f32 %v38, %v165
  %v167 = vpop.f32.mrb[0].mxu0
  %168 = vmatprep.mubr.f32.mxu0 0.0
  %169 = vmatmul.mubr.f32.gmra.mrb[0].mxu0 %v63
  %v170 = vpop.f32.mrb[0].mxu0
  %v171 = vadd.f32 %v38, %v170
  %v172 = vpop.f32.mrb[0].mxu0
  %173 = vdwg.mxu0
  %v174 = vmax.f32 %v136, 0.0
  %v175 = vmax.f32 %v141, 0.0
  %v176 = vmax.f32 %v146, 0.0
  %v177 = vmax.f32 %v151, 0.0
  %v178 = vmax.f32 %v156, 0.0
  %v179 = vmax.f32 %v161, 0.0
  %v180 = vmax.f32 %v166, 0.0
  %v181 = vmax.f32 %v171, 0.0
  %v182 = vld [vmem:[%s3] sm:$0xff]
  %v183 = vld [vmem:[%s3 + $0x8] sm:$0xff]
  %v184 = vld [vmem:[%s3 + $0x10] sm:$0xff]
  %v185 = vld [vmem:[%s3 + $0x18] sm:$0xff]
  %v186 = vld [vmem:[%s3 + $0x20] sm:$0xff]
  %v187 = vld [vmem:[%s3 + $0x28] sm:$0xff]
  %v188 = vld [vmem:[%s3 + $0x30] sm:$0xff]
  %v189 = vld [vmem:[%s3 + $0x38] sm:$0xff]
  %v190 = vld [vmem:[%s4] sm:$0x3]
  %v192 = vlaneseq
  %v193 = vshrl.u32 %v192, 7
  %v194 = vsub.s32 0, %v193
  %v195 = vrot.slane %v190, %v194
  %v196 = vlaneseq
  %v197 = vshrl.u32 %v196, 7
  %v198 = vsub.s32 1, %v197
  %v199 = vrot.slane %v190, %v198
  %vm202 = vcmask 261120
  %v204 = vsel %vm202, %v174, 0
  %v207 = vsel %vm202, %v175, 0
  %v210 = vsel %vm202, %v176, 0
  %v213 = vsel %vm202, %v177, 0
  %v216 = vsel %vm202, %v178, 0
  %v219 = vsel %vm202, %v179, 0
  %v222 = vsel %vm202, %v180, 0
  %v225 = vsel %vm202, %v181, 0
  %227 = vmatprep.subr.mxu0 %v183
  %228 = vmatpush1.msra.mxu0 %v182
  %229 = vmatprep.subr.mxu0 %v185
  %230 = vmatpush1.msra.mxu0 %v184
  %231 = vmatprep.subr.mxu0 %v187
  %232 = vmatpush1.msra.mxu0 %v186
  %233 = vmatprep.subr.mxu0 %v189
  %234 = vmatpush1.msra.mxu0 %v188
  %235 = vmatprep.subr.mxu0 0.0
  %236 = vmatpush1.msra.mxu0 0.0
  %237 = vmatprep.subr.mxu0 0.0
  %238 = vmatpush1.msra.mxu0 0.0
  %239 = vmatprep.subr.mxu0 0.0
  %240 = vmatpush1.msra.mxu0 0.0
  %241 = vmatprep.subr.mxu0 0.0
  %242 = vmatpush1.msra.mxu0 0.0
  %243 = vmatprep.subr.mxu0 0.0
  %244 = vmatpush1.msra.mxu0 0.0
  %245 = vmatprep.subr.mxu0 0.0
  %246 = vmatpush1.msra.mxu0 0.0
  %247 = vmatprep.subr.mxu0 0.0
  %248 = vmatpush1.msra.mxu0 0.0
  %249 = vmatprep.subr.mxu0 0.0
  %250 = vmatpush1.msra.mxu0 0.0
  %251 = vmatprep.subr.mxu0 0.0
  %252 = vmatpush1.msra.mxu0 0.0
  %253 = vmatprep.subr.mxu0 0.0
  %254 = vmatpush1.msra.mxu0 0.0
  %255 = vmatprep.subr.mxu0 0.0
  %256 = vmatpush1.msra.mxu0 0.0
  %257 = vmatprep.subr.mxu0 0.0
  %258 = vmatpush1.msra.mxu0 0.0
  %259 = vmatprep.subr.mxu0 0.0
  %260 = vmatpush1.msra.mxu0 0.0
  %261 = vmatprep.subr.mxu0 0.0
  %262 = vmatpush1.msra.mxu0 0.0
  %263 = vmatprep.subr.mxu0 0.0
  %264 = vmatpush1.msra.mxu0 0.0
  %265 = vmatprep.subr.mxu0 0.0
  %266 = vmatpush1.msra.mxu0 0.0
  %267 = vmatprep.subr.mxu0 0.0
  %268 = vmatpush1.msra.mxu0 0.0
  %269 = vmatprep.subr.mxu0 0.0
  %270 = vmatpush1.msra.mxu0 0.0
  %271 = vmatprep.subr.mxu0 0.0
  %272 = vmatpush1.msra.mxu0 0.0
  %273 = vmatprep.subr.mxu0 0.0
  %274 = vmatpush1.msra.mxu0 0.0
  %275 = vmatprep.subr.mxu0 0.0
  %276 = vmatpush1.msra.mxu0 0.0
  %277 = vmatprep.subr.mxu0 0.0
  %278 = vmatpush1.msra.mxu0 0.0
  %279 = vmatprep.subr.mxu0 0.0
  %280 = vmatpush1.msra.mxu0 0.0
  %281 = vmatprep.subr.mxu0 0.0
  %282 = vmatpush1.msra.mxu0 0.0
  %283 = vmatprep.subr.mxu0 0.0
  %284 = vmatpush1.msra.mxu0 0.0
  %285 = vmatprep.subr.mxu0 0.0
  %286 = vmatpush1.msra.mxu0 0.0
  %287 = vmatprep.subr.mxu0 0.0
  %288 = vmatpush1.msra.mxu0 0.0
  %289 = vmatprep.subr.mxu0 0.0
  %290 = vmatpush1.msra.mxu0 0.0
  %291 = vmatprep.mubr.f32.mxu0 0.0
  %292 = vmatmul.mubr.f32.gmra.mrb[0].mxu0 %v204
  %v293 = vpop.f32.mrb[0].mxu0
  %v294 = vadd.f32 %v195, %v293
  %v295 = vpop.f32.mrb[0].mxu0
  %v296 = vadd.f32 %v199, %v295
  %297 = vmatprep.mubr.f32.mxu0 0.0
  %298 = vmatmul.mubr.f32.gmra.mrb[0].mxu0 %v207
  %v299 = vpop.f32.mrb[0].mxu0
  %v300 = vadd.f32 %v195, %v299
  %v301 = vpop.f32.mrb[0].mxu0
  %v302 = vadd.f32 %v199, %v301
  %303 = vmatprep.mubr.f32.mxu0 0.0
  %304 = vmatmul.mubr.f32.gmra.mrb[0].mxu0 %v210
  %v305 = vpop.f32.mrb[0].mxu0
  %v306 = vadd.f32 %v195, %v305
  %v307 = vpop.f32.mrb[0].mxu0
  %v308 = vadd.f32 %v199, %v307
  %309 = vmatprep.mubr.f32.mxu0 0.0
  %310 = vmatmul.mubr.f32.gmra.mrb[0].mxu0 %v213
  %v311 = vpop.f32.mrb[0].mxu0
  %v312 = vadd.f32 %v195, %v311
  %v313 = vpop.f32.mrb[0].mxu0
  %v314 = vadd.f32 %v199, %v313
  %315 = vmatprep.mubr.f32.mxu0 0.0
  %316 = vmatmul.mubr.f32.gmra.mrb[0].mxu0 %v216
  %v317 = vpop.f32.mrb[0].mxu0
  %v318 = vadd.f32 %v195, %v317
  %v319 = vpop.f32.mrb[0].mxu0
  %v320 = vadd.f32 %v199, %v319
  %321 = vmatprep.mubr.f32.mxu0 0.0
  %322 = vmatmul.mubr.f32.gmra.mrb[0].mxu0 %v219
  %v323 = vpop.f32.mrb[0].mxu0
  %v324 = vadd.f32 %v195, %v323
  %v325 = vpop.f32.mrb[0].mxu0
  %v326 = vadd.f32 %v199, %v325
  %327 = vmatprep.mubr.f32.mxu0 0.0
  %328 = vmatmul.mubr.f32.gmra.mrb[0].mxu0 %v222
  %v329 = vpop.f32.mrb[0].mxu0
  %v330 = vadd.f32 %v195, %v329
  %v331 = vpop.f32.mrb[0].mxu0
  %v332 = vadd.f32 %v199, %v331
  %333 = vmatprep.mubr.f32.mxu0 0.0
  %334 = vmatmul.mubr.f32.gmra.mrb[0].mxu0 %v225
  %v335 = vpop.f32.mrb[0].mxu0
  %v336 = vadd.f32 %v195, %v335
  %v337 = vpop.f32.mrb[0].mxu0
  %v338 = vadd.f32 %v199, %v337
  %339 = vdwg.mxu0
  %340 = vst [vmem:[#allocation2] sm:$0xff] %v294
  %341 = vst [vmem:[#allocation2 + $0x8] sm:$0xff] %v296
  %342 = vst [vmem:[#allocation2 + $0x10] sm:$0xff] %v300
  %343 = vst [vmem:[#allocation2 + $0x18] sm:$0xff] %v302
  %344 = vst [vmem:[#allocation2 + $0x20] sm:$0xff] %v306
  %345 = vst [vmem:[#allocation2 + $0x28] sm:$0xff] %v308
  %346 = vst [vmem:[#allocation2 + $0x30] sm:$0xff] %v312
  %347 = vst [vmem:[#allocation2 + $0x38] sm:$0xff] %v314
  %348 = vst [vmem:[#allocation2 + $0x40] sm:$0xff] %v318
  %349 = vst [vmem:[#allocation2 + $0x48] sm:$0xff] %v320
  %350 = vst [vmem:[#allocation2 + $0x50] sm:$0xff] %v324
  %351 = vst [vmem:[#allocation2 + $0x58] sm:$0xff] %v326
  %352 = vst [vmem:[#allocation2 + $0x60] sm:$0xff] %v330
  %353 = vst [vmem:[#allocation2 + $0x68] sm:$0xff] %v332
  %354 = vst [vmem:[#allocation2 + $0x70] sm:$0xff] %v336
  %355 = vst [vmem:[#allocation2 + $0x78] sm:$0xff] %v338
  %v356 = vld [vmem:[%s5] sm:$0xff]
  %v357 = vld [vmem:[%s5 + $0x8] sm:$0xff]
  %v358 = vld [vmem:[%s5 + $0x10] sm:$0xff]
  %v359 = vld [vmem:[%s5 + $0x18] sm:$0xff]
  %v360 = vld [vmem:[%s5 + $0x20] sm:$0xff]
  %v361 = vld [vmem:[%s5 + $0x28] sm:$0xff]
  %v362 = vld [vmem:[%s5 + $0x30] sm:$0xff]
  %v363 = vld [vmem:[%s5 + $0x38] sm:$0xff]
  %v364 = vld [vmem:[%s5 + $0x40] sm:$0xff]
  %v365 = vld [vmem:[%s5 + $0x48] sm:$0xff]
  %v366 = vld [vmem:[%s5 + $0x50] sm:$0xff]
  %v367 = vld [vmem:[%s5 + $0x58] sm:$0xff]
  %v368 = vld [vmem:[%s5 + $0x60] sm:$0xff]
  %v369 = vld [vmem:[%s5 + $0x68] sm:$0xff]
  %v370 = vld [vmem:[%s5 + $0x70] sm:$0xff]
  %v371 = vld [vmem:[%s5 + $0x78] sm:$0xff]
  %vm372 = vcmask 523264
  %v374 = vsel %vm372, 0.0, 0
  %376 = vmatprep.subr.mxu0 %v357
  %377 = vmatpush1.msra.mxu0 %v356
  %378 = vmatprep.subr.mxu0 %v359
  %379 = vmatpush1.msra.mxu0 %v358
  %380 = vmatprep.subr.mxu0 %v361
  %381 = vmatpush1.msra.mxu0 %v360
  %382 = vmatprep.subr.mxu0 %v363
  %383 = vmatpush1.msra.mxu0 %v362
  %384 = vmatprep.subr.mxu0 %v365
  %385 = vmatpush1.msra.mxu0 %v364
  %386 = vmatprep.subr.mxu0 %v367
  %387 = vmatpush1.msra.mxu0 %v366
  %388 = vmatprep.subr.mxu0 %v369
  %389 = vmatpush1.msra.mxu0 %v368
  %390 = vmatprep.subr.mxu0 %v371
  %391 = vmatpush1.msra.mxu0 %v370
  %392 = vmatprep.subr.mxu0 0.0
  %393 = vmatpush1.msra.mxu0 0.0
  %394 = vmatprep.subr.mxu0 0.0
  %395 = vmatpush1.msra.mxu0 0.0
  %396 = vmatprep.subr.mxu0 0.0
  %397 = vmatpush1.msra.mxu0 0.0
  %398 = vmatprep.subr.mxu0 0.0
  %399 = vmatpush1.msra.mxu0 0.0
  %400 = vmatprep.subr.mxu0 0.0
  %401 = vmatpush1.msra.mxu0 0.0
  %402 = vmatprep.subr.mxu0 0.0
  %403 = vmatpush1.msra.mxu0 0.0
  %404 = vmatprep.subr.mxu0 0.0
  %405 = vmatpush1.msra.mxu0 0.0
  %406 = vmatprep.subr.mxu0 0.0
  %407 = vmatpush1.msra.mxu0 0.0
  %408 = vmatprep.subr.mxu0 0.0
  %409 = vmatpush1.msra.mxu0 0.0
  %410 = vmatprep.subr.mxu0 0.0
  %411 = vmatpush1.msra.mxu0 0.0
  %412 = vmatprep.subr.mxu0 0.0
  %413 = vmatpush1.msra.mxu0 0.0
  %414 = vmatprep.subr.mxu0 0.0
  %415 = vmatpush1.msra.mxu0 0.0
  %416 = vmatprep.subr.mxu0 0.0
  %417 = vmatpush1.msra.mxu0 0.0
  %418 = vmatprep.subr.mxu0 0.0
  %419 = vmatpush1.msra.mxu0 0.0
  %420 = vmatprep.subr.mxu0 0.0
  %421 = vmatpush1.msra.mxu0 0.0
  %422 = vmatprep.subr.mxu0 0.0
  %423 = vmatpush1.msra.mxu0 0.0
  %424 = vmatprep.subr.mxu0 0.0
  %425 = vmatpush1.msra.mxu0 0.0
  %426 = vmatprep.subr.mxu0 0.0
  %427 = vmatpush1.msra.mxu0 0.0
  %428 = vmatprep.subr.mxu0 0.0
  %429 = vmatpush1.msra.mxu0 0.0
  %430 = vmatprep.subr.mxu0 0.0
  %431 = vmatpush1.msra.mxu0 0.0
  %432 = vmatprep.subr.mxu0 0.0
  %433 = vmatpush1.msra.mxu0 0.0
  %434 = vmatprep.subr.mxu0 0.0
  %435 = vmatpush1.msra.mxu0 0.0
  %436 = vmatprep.subr.mxu0 0.0
  %437 = vmatpush1.msra.mxu0 0.0
  %438 = vmatprep.subr.mxu0 0.0
  %439 = vmatpush1.msra.mxu0 0.0
  %440 = vmatprep.mubr.f32.mxu0 0.0
  %441 = vmatmul.mubr.f32.gmra.mrb[0].mxu0 %v374
  %v442 = vpop.f32.mrb[0].mxu0
  %v443 = vadd.f32 0.0, %v442
  %v444 = vpop.f32.mrb[0].mxu0
  %v445 = vadd.f32 0.0, %v444
  %446 = vdwg.mxu0
  %s447 = smul.u32 0, 2
  %s448 = smul.addr %s447, 8
  %s449 = scalar_lea.vmem [#allocation2], %s448
  %v450 = vld [vmem:[%s449] sm:$0xff]
  %v451 = vadd.f32 %v450, %v443
  %s452 = smul.u32 7, 2
  %s453 = smul.addr %s452, 8
  %s454 = scalar_lea.vmem [#allocation2], %s453
  %v455 = vld [vmem:[%s454 + $0x8] sm:$0xff]
  %v456 = vadd.f32 %v455, %v445
  %v457 = vxor.u32 %v451, 2147483648
  %v458 = vmul.f32 %v457, 1.442695
  %v459 = vpow.pop %v458
  %v460 = vadd.f32 %v459, 1.0
  %v461 = vrcp.pop %v460
  %v462 = vmul.f32 1.0, %v461
  %v463 = vtanh.pop %v451
  %v464 = vmul.f32 %v462, 0.0
  %466 = vrot.lane.b32.xlu0 %v463, 64
  %v467 = vpop.permute.xlu0 %466
  %v469 = vmul.f32 %v462, %v467
  %471 = vrot.lane.b32.xlu0 %v469, 32
  %v472 = vpop.permute.xlu0 %471
  %v474 = vadd.f32 %v464, %v472
  %v475 = vtanh.pop %v474
  %477 = vrot.lane.b32.xlu0 %v475, 64
  %v478 = vpop.permute.xlu0 %477
  %v480 = vmul.f32 %v462, %v478
  %v481 = vxor.u32 %v456, 2147483648
  %v482 = vmul.f32 %v481, 1.442695
  %v483 = vpow.pop %v482
  %v484 = vadd.f32 %v483, 1.0
  %v485 = vrcp.pop %v484
  %v486 = vmul.f32 1.0, %v485
  %v487 = vtanh.pop %v456
  %v488 = vmul.f32 %v486, 0.0
  %490 = vrot.lane.b32.xlu0 %v487, 64
  %v491 = vpop.permute.xlu0 %490
  %v493 = vmul.f32 %v486, %v491
  %495 = vrot.lane.b32.xlu0 %v493, 32
  %v496 = vpop.permute.xlu0 %495
  %v498 = vadd.f32 %v488, %v496
  %v499 = vtanh.pop %v498
  %501 = vrot.lane.b32.xlu0 %v499, 64
  %v502 = vpop.permute.xlu0 %501
  %v504 = vmul.f32 %v486, %v502
  %506 = vrot.lane.b32.xlu0 %v480, 32
  %v507 = vpop.permute.xlu0 %506
  %509 = vst.msk [vmem:[%s6] sm:$0xff] %vm202, %v507
  %511 = vrot.lane.b32.xlu0 %v504, 64
  %v512 = vpop.permute.xlu0 %511
  %s514 = scalar_lea.vmem %s6, 56
  %vm515 = vcmask 523520
  %516 = vst.msk [vmem:[%s514] sm:$0xff] %vm515, %v512
  %v517 = vsel %vm202, %v507, %v512
  %v519 = vsel %vm372, %v517, 0
  %521 = vmatprep.subr.mxu0 %v357
  %522 = vmatpush1.msra.mxu0 %v356
  %523 = vmatprep.subr.mxu0 %v359
  %524 = vmatpush1.msra.mxu0 %v358
  %525 = vmatprep.subr.mxu0 %v361
  %526 = vmatpush1.msra.mxu0 %v360
  %527 = vmatprep.subr.mxu0 %v363
  %528 = vmatpush1.msra.mxu0 %v362
  %529 = vmatprep.subr.mxu0 %v365
  %530 = vmatpush1.msra.mxu0 %v364
  %531 = vmatprep.subr.mxu0 %v367
  %532 = vmatpush1.msra.mxu0 %v366
  %533 = vmatprep.subr.mxu0 %v369
  %534 = vmatpush1.msra.mxu0 %v368
  %535 = vmatprep.subr.mxu0 %v371
  %536 = vmatpush1.msra.mxu0 %v370
  %537 = vmatprep.subr.mxu0 0.0
  %538 = vmatpush1.msra.mxu0 0.0
  %539 = vmatprep.subr.mxu0 0.0
  %540 = vmatpush1.msra.mxu0 0.0
  %541 = vmatprep.subr.mxu0 0.0
  %542 = vmatpush1.msra.mxu0 0.0
  %543 = vmatprep.subr.mxu0 0.0
  %544 = vmatpush1.msra.mxu0 0.0
  %545 = vmatprep.subr.mxu0 0.0
  %546 = vmatpush1.msra.mxu0 0.0
  %547 = vmatprep.subr.mxu0 0.0
  %548 = vmatpush1.msra.mxu0 0.0
  %549 = vmatprep.subr.mxu0 0.0
  %550 = vmatpush1.msra.mxu0 0.0
  %551 = vmatprep.subr.mxu0 0.0
  %552 = vmatpush1.msra.mxu0 0.0
  %553 = vmatprep.subr.mxu0 0.0
  %554 = vmatpush1.msra.mxu0 0.0
  %555 = vmatprep.subr.mxu0 0.0
  %556 = vmatpush1.msra.mxu0 0.0
  %557 = vmatprep.subr.mxu0 0.0
  %558 = vmatpush1.msra.mxu0 0.0
  %559 = vmatprep.subr.mxu0 0.0
  %560 = vmatpush1.msra.mxu0 0.0
  %561 = vmatprep.subr.mxu0 0.0
  %562 = vmatpush1.msra.mxu0 0.0
  %563 = vmatprep.subr.mxu0 0.0
  %564 = vmatpush1.msra.mxu0 0.0
  %565 = vmatprep.subr.mxu0 0.0
  %566 = vmatpush1.msra.mxu0 0.0
  %567 = vmatprep.subr.mxu0 0.0
  %568 = vmatpush1.msra.mxu0 0.0
  %569 = vmatprep.subr.mxu0 0.0
  %570 = vmatpush1.msra.mxu0 0.0
  %571 = vmatprep.subr.mxu0 0.0
  %572 = vmatpush1.msra.mxu0 0.0
  %573 = vmatprep.subr.mxu0 0.0
  %574 = vmatpush1.msra.mxu0 0.0
  %575 = vmatprep.subr.mxu0 0.0
  %576 = vmatpush1.msra.mxu0 0.0
  %577 = vmatprep.subr.mxu0 0.0
  %578 = vmatpush1.msra.mxu0 0.0
  %579 = vmatprep.subr.mxu0 0.0
  %580 = vmatpush1.msra.mxu0 0.0
  %581 = vmatprep.subr.mxu0 0.0
  %582 = vmatpush1.msra.mxu0 0.0
  %583 = vmatprep.subr.mxu0 0.0
  %584 = vmatpush1.msra.mxu0 0.0
  %585 = vmatprep.mubr.f32.mxu0 0.0
  %586 = vmatmul.mubr.f32.gmra.mrb[0].mxu0 %v519
  %v587 = vpop.f32.mrb[0].mxu0
  %v588 = vadd.f32 0.0, %v587
  %v589 = vpop.f32.mrb[0].mxu0
  %v590 = vadd.f32 0.0, %v589
  %591 = vdwg.mxu0
  %s592 = smul.u32 1, 2
  %s593 = smul.addr %s592, 8
  %s594 = scalar_lea.vmem [#allocation2], %s593
  %v595 = vld [vmem:[%s594] sm:$0xff]
  %v596 = vadd.f32 %v595, %v588
  %s597 = smul.u32 6, 2
  %s598 = smul.addr %s597, 8
  %s599 = scalar_lea.vmem [#allocation2], %s598
  %v600 = vld [vmem:[%s599 + $0x8] sm:$0xff]
  %v601 = vadd.f32 %v600, %v590
  %v602 = vxor.u32 %v596, 2147483648
  %v603 = vmul.f32 %v602, 1.442695
  %v604 = vpow.pop %v603
  %v605 = vadd.f32 %v604, 1.0
  %v606 = vrcp.pop %v605
  %v607 = vmul.f32 1.0, %v606
  %v608 = vtanh.pop %v596
  %v609 = vmul.f32 %v607, %v474
  %611 = vrot.lane.b32.xlu0 %v608, 64
  %v612 = vpop.permute.xlu0 %611
  %v614 = vmul.f32 %v607, %v612
  %616 = vrot.lane.b32.xlu0 %v614, 32
  %v617 = vpop.permute.xlu0 %616
  %v619 = vadd.f32 %v609, %v617
  %v620 = vtanh.pop %v619
  %622 = vrot.lane.b32.xlu0 %v620, 64
  %v623 = vpop.permute.xlu0 %622
  %v625 = vmul.f32 %v607, %v623
  %v626 = vxor.u32 %v601, 2147483648
  %v627 = vmul.f32 %v626, 1.442695
  %v628 = vpow.pop %v627
  %v629 = vadd.f32 %v628, 1.0
  %v630 = vrcp.pop %v629
  %v631 = vmul.f32 1.0, %v630
  %v632 = vtanh.pop %v601
  %v633 = vmul.f32 %v631, %v498
  %635 = vrot.lane.b32.xlu0 %v632, 64
  %v636 = vpop.permute.xlu0 %635
  %v638 = vmul.f32 %v631, %v636
  %640 = vrot.lane.b32.xlu0 %v638, 32
  %v641 = vpop.permute.xlu0 %640
  %v643 = vadd.f32 %v633, %v641
  %v644 = vtanh.pop %v643
  %646 = vrot.lane.b32.xlu0 %v644, 64
  %v647 = vpop.permute.xlu0 %646
  %v649 = vmul.f32 %v631, %v647
  %651 = vrot.lane.b32.xlu0 %v625, 32
  %v652 = vpop.permute.xlu0 %651
  %s654 = scalar_lea.vmem %s6, 8
  %655 = vst.msk [vmem:[%s654] sm:$0xff] %vm202, %v652
  %657 = vrot.lane.b32.xlu0 %v649, 64
  %v658 = vpop.permute.xlu0 %657
  %s660 = scalar_lea.vmem %s6, 48
  %661 = vst.msk [vmem:[%s660] sm:$0xff] %vm515, %v658
  %v662 = vsel %vm202, %v652, %v658
  %v664 = vsel %vm372, %v662, 0
  %666 = vmatprep.subr.mxu0 %v357
  %667 = vmatpush1.msra.mxu0 %v356
  %668 = vmatprep.subr.mxu0 %v359
  %669 = vmatpush1.msra.mxu0 %v358
  %670 = vmatprep.subr.mxu0 %v361
  %671 = vmatpush1.msra.mxu0 %v360
  %672 = vmatprep.subr.mxu0 %v363
  %673 = vmatpush1.msra.mxu0 %v362
  %674 = vmatprep.subr.mxu0 %v365
  %675 = vmatpush1.msra.mxu0 %v364
  %676 = vmatprep.subr.mxu0 %v367
  %677 = vmatpush1.msra.mxu0 %v366
  %678 = vmatprep.subr.mxu0 %v369
  %679 = vmatpush1.msra.mxu0 %v368
  %680 = vmatprep.subr.mxu0 %v371
  %681 = vmatpush1.msra.mxu0 %v370
  %682 = vmatprep.subr.mxu0 0.0
  %683 = vmatpush1.msra.mxu0 0.0
  %684 = vmatprep.subr.mxu0 0.0
  %685 = vmatpush1.msra.mxu0 0.0
  %686 = vmatprep.subr.mxu0 0.0
  %687 = vmatpush1.msra.mxu0 0.0
  %688 = vmatprep.subr.mxu0 0.0
  %689 = vmatpush1.msra.mxu0 0.0
  %690 = vmatprep.subr.mxu0 0.0
  %691 = vmatpush1.msra.mxu0 0.0
  %692 = vmatprep.subr.mxu0 0.0
  %693 = vmatpush1.msra.mxu0 0.0
  %694 = vmatprep.subr.mxu0 0.0
  %695 = vmatpush1.msra.mxu0 0.0
  %696 = vmatprep.subr.mxu0 0.0
  %697 = vmatpush1.msra.mxu0 0.0
  %698 = vmatprep.subr.mxu0 0.0
  %699 = vmatpush1.msra.mxu0 0.0
  %700 = vmatprep.subr.mxu0 0.0
  %701 = vmatpush1.msra.mxu0 0.0
  %702 = vmatprep.subr.mxu0 0.0
  %703 = vmatpush1.msra.mxu0 0.0
  %704 = vmatprep.subr.mxu0 0.0
  %705 = vmatpush1.msra.mxu0 0.0
  %706 = vmatprep.subr.mxu0 0.0
  %707 = vmatpush1.msra.mxu0 0.0
  %708 = vmatprep.subr.mxu0 0.0
  %709 = vmatpush1.msra.mxu0 0.0
  %710 = vmatprep.subr.mxu0 0.0
  %711 = vmatpush1.msra.mxu0 0.0
  %712 = vmatprep.subr.mxu0 0.0
  %713 = vmatpush1.msra.mxu0 0.0
  %714 = vmatprep.subr.mxu0 0.0
  %715 = vmatpush1.msra.mxu0 0.0
  %716 = vmatprep.subr.mxu0 0.0
  %717 = vmatpush1.msra.mxu0 0.0
  %718 = vmatprep.subr.mxu0 0.0
  %719 = vmatpush1.msra.mxu0 0.0
  %720 = vmatprep.subr.mxu0 0.0
  %721 = vmatpush1.msra.mxu0 0.0
  %722 = vmatprep.subr.mxu0 0.0
  %723 = vmatpush1.msra.mxu0 0.0
  %724 = vmatprep.subr.mxu0 0.0
  %725 = vmatpush1.msra.mxu0 0.0
  %726 = vmatprep.subr.mxu0 0.0
  %727 = vmatpush1.msra.mxu0 0.0
  %728 = vmatprep.subr.mxu0 0.0
  %729 = vmatpush1.msra.mxu0 0.0
  %730 = vmatprep.mubr.f32.mxu0 0.0
  %731 = vmatmul.mubr.f32.gmra.mrb[0].mxu0 %v664
  %v732 = vpop.f32.mrb[0].mxu0
  %v733 = vadd.f32 0.0, %v732
  %v734 = vpop.f32.mrb[0].mxu0
  %v735 = vadd.f32 0.0, %v734
  %736 = vdwg.mxu0
  %s737 = smul.u32 2, 2
  %s738 = smul.addr %s737, 8
  %s739 = scalar_lea.vmem [#allocation2], %s738
  %v740 = vld [vmem:[%s739] sm:$0xff]
  %v741 = vadd.f32 %v740, %v733
  %s742 = smul.u32 5, 2
  %s743 = smul.addr %s742, 8
  %s744 = scalar_lea.vmem [#allocation2], %s743
  %v745 = vld [vmem:[%s744 + $0x8] sm:$0xff]
  %v746 = vadd.f32 %v745, %v735
  %v747 = vxor.u32 %v741, 2147483648
  %v748 = vmul.f32 %v747, 1.442695
  %v749 = vpow.pop %v748
  %v750 = vadd.f32 %v749, 1.0
  %v751 = vrcp.pop %v750
  %v752 = vmul.f32 1.0, %v751
  %v753 = vtanh.pop %v741
  %v754 = vmul.f32 %v752, %v619
  %756 = vrot.lane.b32.xlu0 %v753, 64
  %v757 = vpop.permute.xlu0 %756
  %v759 = vmul.f32 %v752, %v757
  %761 = vrot.lane.b32.xlu0 %v759, 32
  %v762 = vpop.permute.xlu0 %761
  %v764 = vadd.f32 %v754, %v762
  %v765 = vtanh.pop %v764
  %767 = vrot.lane.b32.xlu0 %v765, 64
  %v768 = vpop.permute.xlu0 %767
  %v770 = vmul.f32 %v752, %v768
  %v771 = vxor.u32 %v746, 2147483648
  %v772 = vmul.f32 %v771, 1.442695
  %v773 = vpow.pop %v772
  %v774 = vadd.f32 %v773, 1.0
  %v775 = vrcp.pop %v774
  %v776 = vmul.f32 1.0, %v775
  %v777 = vtanh.pop %v746
  %v778 = vmul.f32 %v776, %v643
  %780 = vrot.lane.b32.xlu0 %v777, 64
  %v781 = vpop.permute.xlu0 %780
  %v783 = vmul.f32 %v776, %v781
  %785 = vrot.lane.b32.xlu0 %v783, 32
  %v786 = vpop.permute.xlu0 %785
  %v788 = vadd.f32 %v778, %v786
  %v789 = vtanh.pop %v788
  %791 = vrot.lane.b32.xlu0 %v789, 64
  %v792 = vpop.permute.xlu0 %791
  %v794 = vmul.f32 %v776, %v792
  %796 = vrot.lane.b32.xlu0 %v770, 32
  %v797 = vpop.permute.xlu0 %796
  %s799 = scalar_lea.vmem %s6, 16
  %800 = vst.msk [vmem:[%s799] sm:$0xff] %vm202, %v797
  %802 = vrot.lane.b32.xlu0 %v794, 64
  %v803 = vpop.permute.xlu0 %802
  %s805 = scalar_lea.vmem %s6, 40
  %806 = vst.msk [vmem:[%s805] sm:$0xff] %vm515, %v803
  %v807 = vsel %vm202, %v797, %v803
  %v809 = vsel %vm372, %v807, 0
  %811 = vmatprep.subr.mxu0 %v357
  %812 = vmatpush1.msra.mxu0 %v356
  %813 = vmatprep.subr.mxu0 %v359
  %814 = vmatpush1.msra.mxu0 %v358
  %815 = vmatprep.subr.mxu0 %v361
  %816 = vmatpush1.msra.mxu0 %v360
  %817 = vmatprep.subr.mxu0 %v363
  %818 = vmatpush1.msra.mxu0 %v362
  %819 = vmatprep.subr.mxu0 %v365
  %820 = vmatpush1.msra.mxu0 %v364
  %821 = vmatprep.subr.mxu0 %v367
  %822 = vmatpush1.msra.mxu0 %v366
  %823 = vmatprep.subr.mxu0 %v369
  %824 = vmatpush1.msra.mxu0 %v368
  %825 = vmatprep.subr.mxu0 %v371
  %826 = vmatpush1.msra.mxu0 %v370
  %827 = vmatprep.subr.mxu0 0.0
  %828 = vmatpush1.msra.mxu0 0.0
  %829 = vmatprep.subr.mxu0 0.0
  %830 = vmatpush1.msra.mxu0 0.0
  %831 = vmatprep.subr.mxu0 0.0
  %832 = vmatpush1.msra.mxu0 0.0
  %833 = vmatprep.subr.mxu0 0.0
  %834 = vmatpush1.msra.mxu0 0.0
  %835 = vmatprep.subr.mxu0 0.0
  %836 = vmatpush1.msra.mxu0 0.0
  %837 = vmatprep.subr.mxu0 0.0
  %838 = vmatpush1.msra.mxu0 0.0
  %839 = vmatprep.subr.mxu0 0.0
  %840 = vmatpush1.msra.mxu0 0.0
  %841 = vmatprep.subr.mxu0 0.0
  %842 = vmatpush1.msra.mxu0 0.0
  %843 = vmatprep.subr.mxu0 0.0
  %844 = vmatpush1.msra.mxu0 0.0
  %845 = vmatprep.subr.mxu0 0.0
  %846 = vmatpush1.msra.mxu0 0.0
  %847 = vmatprep.subr.mxu0 0.0
  %848 = vmatpush1.msra.mxu0 0.0
  %849 = vmatprep.subr.mxu0 0.0
  %850 = vmatpush1.msra.mxu0 0.0
  %851 = vmatprep.subr.mxu0 0.0
  %852 = vmatpush1.msra.mxu0 0.0
  %853 = vmatprep.subr.mxu0 0.0
  %854 = vmatpush1.msra.mxu0 0.0
  %855 = vmatprep.subr.mxu0 0.0
  %856 = vmatpush1.msra.mxu0 0.0
  %857 = vmatprep.subr.mxu0 0.0
  %858 = vmatpush1.msra.mxu0 0.0
  %859 = vmatprep.subr.mxu0 0.0
  %860 = vmatpush1.msra.mxu0 0.0
  %861 = vmatprep.subr.mxu0 0.0
  %862 = vmatpush1.msra.mxu0 0.0
  %863 = vmatprep.subr.mxu0 0.0
  %864 = vmatpush1.msra.mxu0 0.0
  %865 = vmatprep.subr.mxu0 0.0
  %866 = vmatpush1.msra.mxu0 0.0
  %867 = vmatprep.subr.mxu0 0.0
  %868 = vmatpush1.msra.mxu0 0.0
  %869 = vmatprep.subr.mxu0 0.0
  %870 = vmatpush1.msra.mxu0 0.0
  %871 = vmatprep.subr.mxu0 0.0
  %872 = vmatpush1.msra.mxu0 0.0
  %873 = vmatprep.subr.mxu0 0.0
  %874 = vmatpush1.msra.mxu0 0.0
  %875 = vmatprep.mubr.f32.mxu0 0.0
  %876 = vmatmul.mubr.f32.gmra.mrb[0].mxu0 %v809
  %v877 = vpop.f32.mrb[0].mxu0
  %v878 = vadd.f32 0.0, %v877
  %v879 = vpop.f32.mrb[0].mxu0
  %v880 = vadd.f32 0.0, %v879
  %881 = vdwg.mxu0
  %s882 = smul.u32 3, 2
  %s883 = smul.addr %s882, 8
  %s884 = scalar_lea.vmem [#allocation2], %s883
  %v885 = vld [vmem:[%s884] sm:$0xff]
  %v886 = vadd.f32 %v885, %v878
  %s887 = smul.u32 4, 2
  %s888 = smul.addr %s887, 8
  %s889 = scalar_lea.vmem [#allocation2], %s888
  %v890 = vld [vmem:[%s889 + $0x8] sm:$0xff]
  %v891 = vadd.f32 %v890, %v880
  %v892 = vxor.u32 %v886, 2147483648
  %v893 = vmul.f32 %v892, 1.442695
  %v894 = vpow.pop %v893
  %v895 = vadd.f32 %v894, 1.0
  %v896 = vrcp.pop %v895
  %v897 = vmul.f32 1.0, %v896
  %v898 = vtanh.pop %v886
  %v899 = vmul.f32 %v897, %v764
  %901 = vrot.lane.b32.xlu0 %v898, 64
  %v902 = vpop.permute.xlu0 %901
  %v904 = vmul.f32 %v897, %v902
  %906 = vrot.lane.b32.xlu0 %v904, 32
  %v907 = vpop.permute.xlu0 %906
  %v909 = vadd.f32 %v899, %v907
  %v910 = vtanh.pop %v909
  %912 = vrot.lane.b32.xlu0 %v910, 64
  %v913 = vpop.permute.xlu0 %912
  %v915 = vmul.f32 %v897, %v913
  %v916 = vxor.u32 %v891, 2147483648
  %v917 = vmul.f32 %v916, 1.442695
  %v918 = vpow.pop %v917
  %v919 = vadd.f32 %v918, 1.0
  %v920 = vrcp.pop %v919
  %v921 = vmul.f32 1.0, %v920
  %v922 = vtanh.pop %v891
  %v923 = vmul.f32 %v921, %v788
  %925 = vrot.lane.b32.xlu0 %v922, 64
  %v926 = vpop.permute.xlu0 %925
  %v928 = vmul.f32 %v921, %v926
  %930 = vrot.lane.b32.xlu0 %v928, 32
  %v931 = vpop.permute.xlu0 %930
  %v933 = vadd.f32 %v923, %v931
  %v934 = vtanh.pop %v933
  %936 = vrot.lane.b32.xlu0 %v934, 64
  %v937 = vpop.permute.xlu0 %936
  %v939 = vmul.f32 %v921, %v937
  %941 = vrot.lane.b32.xlu0 %v915, 32
  %v942 = vpop.permute.xlu0 %941
  %s944 = scalar_lea.vmem %s6, 24
  %945 = vst.msk [vmem:[%s944] sm:$0xff] %vm202, %v942
  %947 = vrot.lane.b32.xlu0 %v939, 64
  %v948 = vpop.permute.xlu0 %947
  %s950 = scalar_lea.vmem %s6, 32
  %951 = vst.msk [vmem:[%s950] sm:$0xff] %vm515, %v948
  %v952 = vsel %vm202, %v942, %v948
  %v954 = vsel %vm372, %v952, 0
  %956 = vmatprep.subr.mxu0 %v357
  %957 = vmatpush1.msra.mxu0 %v356
  %958 = vmatprep.subr.mxu0 %v359
  %959 = vmatpush1.msra.mxu0 %v358
  %960 = vmatprep.subr.mxu0 %v361
  %961 = vmatpush1.msra.mxu0 %v360
  %962 = vmatprep.subr.mxu0 %v363
  %963 = vmatpush1.msra.mxu0 %v362
  %964 = vmatprep.subr.mxu0 %v365
  %965 = vmatpush1.msra.mxu0 %v364
  %966 = vmatprep.subr.mxu0 %v367
  %967 = vmatpush1.msra.mxu0 %v366
  %968 = vmatprep.subr.mxu0 %v369
  %969 = vmatpush1.msra.mxu0 %v368
  %970 = vmatprep.subr.mxu0 %v371
  %971 = vmatpush1.msra.mxu0 %v370
  %972 = vmatprep.subr.mxu0 0.0
  %973 = vmatpush1.msra.mxu0 0.0
  %974 = vmatprep.subr.mxu0 0.0
  %975 = vmatpush1.msra.mxu0 0.0
  %976 = vmatprep.subr.mxu0 0.0
  %977 = vmatpush1.msra.mxu0 0.0
  %978 = vmatprep.subr.mxu0 0.0
  %979 = vmatpush1.msra.mxu0 0.0
  %980 = vmatprep.subr.mxu0 0.0
  %981 = vmatpush1.msra.mxu0 0.0
  %982 = vmatprep.subr.mxu0 0.0
  %983 = vmatpush1.msra.mxu0 0.0
  %984 = vmatprep.subr.mxu0 0.0
  %985 = vmatpush1.msra.mxu0 0.0
  %986 = vmatprep.subr.mxu0 0.0
  %987 = vmatpush1.msra.mxu0 0.0
  %988 = vmatprep.subr.mxu0 0.0
  %989 = vmatpush1.msra.mxu0 0.0
  %990 = vmatprep.subr.mxu0 0.0
  %991 = vmatpush1.msra.mxu0 0.0
  %992 = vmatprep.subr.mxu0 0.0
  %993 = vmatpush1.msra.mxu0 0.0
  %994 = vmatprep.subr.mxu0 0.0
  %995 = vmatpush1.msra.mxu0 0.0
  %996 = vmatprep.subr.mxu0 0.0
  %997 = vmatpush1.msra.mxu0 0.0
  %998 = vmatprep.subr.mxu0 0.0
  %999 = vmatpush1.msra.mxu0 0.0
  %1000 = vmatprep.subr.mxu0 0.0
  %1001 = vmatpush1.msra.mxu0 0.0
  %1002 = vmatprep.subr.mxu0 0.0
  %1003 = vmatpush1.msra.mxu0 0.0
  %1004 = vmatprep.subr.mxu0 0.0
  %1005 = vmatpush1.msra.mxu0 0.0
  %1006 = vmatprep.subr.mxu0 0.0
  %1007 = vmatpush1.msra.mxu0 0.0
  %1008 = vmatprep.subr.mxu0 0.0
  %1009 = vmatpush1.msra.mxu0 0.0
  %1010 = vmatprep.subr.mxu0 0.0
  %1011 = vmatpush1.msra.mxu0 0.0
  %1012 = vmatprep.subr.mxu0 0.0
  %1013 = vmatpush1.msra.mxu0 0.0
  %1014 = vmatprep.subr.mxu0 0.0
  %1015 = vmatpush1.msra.mxu0 0.0
  %1016 = vmatprep.subr.mxu0 0.0
  %1017 = vmatpush1.msra.mxu0 0.0
  %1018 = vmatprep.subr.mxu0 0.0
  %1019 = vmatpush1.msra.mxu0 0.0
  %1020 = vmatprep.mubr.f32.mxu0 0.0
  %1021 = vmatmul.mubr.f32.gmra.mrb[0].mxu0 %v954
  %v1022 = vpop.f32.mrb[0].mxu0
  %v1023 = vadd.f32 0.0, %v1022
  %v1024 = vpop.f32.mrb[0].mxu0
  %v1025 = vadd.f32 0.0, %v1024
  %1026 = vdwg.mxu0
  %v1027 = vld [vmem:[%s889] sm:$0xff]
  %v1028 = vadd.f32 %v1027, %v1023
  %v1029 = vld [vmem:[%s884 + $0x8] sm:$0xff]
  %v1030 = vadd.f32 %v1029, %v1025
  %v1031 = vxor.u32 %v1028, 2147483648
  %v1032 = vmul.f32 %v1031, 1.442695
  %v1033 = vpow.pop %v1032
  %v1034 = vadd.f32 %v1033, 1.0
  %v1035 = vrcp.pop %v1034
  %v1036 = vmul.f32 1.0, %v1035
  %v1037 = vtanh.pop %v1028
  %v1038 = vmul.f32 %v1036, %v909
  %1040 = vrot.lane.b32.xlu0 %v1037, 64
  %v1041 = vpop.permute.xlu0 %1040
  %v1043 = vmul.f32 %v1036, %v1041
  %1045 = vrot.lane.b32.xlu0 %v1043, 32
  %v1046 = vpop.permute.xlu0 %1045
  %v1048 = vadd.f32 %v1038, %v1046
  %v1049 = vtanh.pop %v1048
  %1051 = vrot.lane.b32.xlu0 %v1049, 64
  %v1052 = vpop.permute.xlu0 %1051
  %v1054 = vmul.f32 %v1036, %v1052
  %v1055 = vxor.u32 %v1030, 2147483648
  %v1056 = vmul.f32 %v1055, 1.442695
  %v1057 = vpow.pop %v1056
  %v1058 = vadd.f32 %v1057, 1.0
  %v1059 = vrcp.pop %v1058
  %v1060 = vmul.f32 1.0, %v1059
  %v1061 = vtanh.pop %v1030
  %v1062 = vmul.f32 %v1060, %v933
  %1064 = vrot.lane.b32.xlu0 %v1061, 64
  %v1065 = vpop.permute.xlu0 %1064
  %v1067 = vmul.f32 %v1060, %v1065
  %1069 = vrot.lane.b32.xlu0 %v1067, 32
  %v1070 = vpop.permute.xlu0 %1069
  %v1072 = vadd.f32 %v1062, %v1070
  %v1073 = vtanh.pop %v1072
  %1075 = vrot.lane.b32.xlu0 %v1073, 64
  %v1076 = vpop.permute.xlu0 %1075
  %v1078 = vmul.f32 %v1060, %v1076
  %1080 = vrot.lane.b32.xlu0 %v1054, 32
  %v1081 = vpop.permute.xlu0 %1080
  %1083 = vst.msk [vmem:[%s950] sm:$0xff] %vm202, %v1081
  %1085 = vrot.lane.b32.xlu0 %v1078, 64
  %v1086 = vpop.permute.xlu0 %1085
  %1088 = vst.msk [vmem:[%s944] sm:$0xff] %vm515, %v1086
  %v1089 = vsel %vm202, %v1081, %v1086
  %v1091 = vsel %vm372, %v1089, 0
  %1093 = vmatprep.subr.mxu0 %v357
  %1094 = vmatpush1.msra.mxu0 %v356
  %1095 = vmatprep.subr.mxu0 %v359
  %1096 = vmatpush1.msra.mxu0 %v358
  %1097 = vmatprep.subr.mxu0 %v361
  %1098 = vmatpush1.msra.mxu0 %v360
  %1099 = vmatprep.subr.mxu0 %v363
  %1100 = vmatpush1.msra.mxu0 %v362
  %1101 = vmatprep.subr.mxu0 %v365
  %1102 = vmatpush1.msra.mxu0 %v364
  %1103 = vmatprep.subr.mxu0 %v367
  %1104 = vmatpush1.msra.mxu0 %v366
  %1105 = vmatprep.subr.mxu0 %v369
  %1106 = vmatpush1.msra.mxu0 %v368
  %1107 = vmatprep.subr.mxu0 %v371
  %1108 = vmatpush1.msra.mxu0 %v370
  %1109 = vmatprep.subr.mxu0 0.0
  %1110 = vmatpush1.msra.mxu0 0.0
  %1111 = vmatprep.subr.mxu0 0.0
  %1112 = vmatpush1.msra.mxu0 0.0
  %1113 = vmatprep.subr.mxu0 0.0
  %1114 = vmatpush1.msra.mxu0 0.0
  %1115 = vmatprep.subr.mxu0 0.0
  %1116 = vmatpush1.msra.mxu0 0.0
  %1117 = vmatprep.subr.mxu0 0.0
  %1118 = vmatpush1.msra.mxu0 0.0
  %1119 = vmatprep.subr.mxu0 0.0
  %1120 = vmatpush1.msra.mxu0 0.0
  %1121 = vmatprep.subr.mxu0 0.0
  %1122 = vmatpush1.msra.mxu0 0.0
  %1123 = vmatprep.subr.mxu0 0.0
  %1124 = vmatpush1.msra.mxu0 0.0
  %1125 = vmatprep.subr.mxu0 0.0
  %1126 = vmatpush1.msra.mxu0 0.0
  %1127 = vmatprep.subr.mxu0 0.0
  %1128 = vmatpush1.msra.mxu0 0.0
  %1129 = vmatprep.subr.mxu0 0.0
  %1130 = vmatpush1.msra.mxu0 0.0
  %1131 = vmatprep.subr.mxu0 0.0
  %1132 = vmatpush1.msra.mxu0 0.0
  %1133 = vmatprep.subr.mxu0 0.0
  %1134 = vmatpush1.msra.mxu0 0.0
  %1135 = vmatprep.subr.mxu0 0.0
  %1136 = vmatpush1.msra.mxu0 0.0
  %1137 = vmatprep.subr.mxu0 0.0
  %1138 = vmatpush1.msra.mxu0 0.0
  %1139 = vmatprep.subr.mxu0 0.0
  %1140 = vmatpush1.msra.mxu0 0.0
  %1141 = vmatprep.subr.mxu0 0.0
  %1142 = vmatpush1.msra.mxu0 0.0
  %1143 = vmatprep.subr.mxu0 0.0
  %1144 = vmatpush1.msra.mxu0 0.0
  %1145 = vmatprep.subr.mxu0 0.0
  %1146 = vmatpush1.msra.mxu0 0.0
  %1147 = vmatprep.subr.mxu0 0.0
  %1148 = vmatpush1.msra.mxu0 0.0
  %1149 = vmatprep.subr.mxu0 0.0
  %1150 = vmatpush1.msra.mxu0 0.0
  %1151 = vmatprep.subr.mxu0 0.0
  %1152 = vmatpush1.msra.mxu0 0.0
  %1153 = vmatprep.subr.mxu0 0.0
  %1154 = vmatpush1.msra.mxu0 0.0
  %1155 = vmatprep.subr.mxu0 0.0
  %1156 = vmatpush1.msra.mxu0 0.0
  %1157 = vmatprep.mubr.f32.mxu0 0.0
  %1158 = vmatmul.mubr.f32.gmra.mrb[0].mxu0 %v1091
  %v1159 = vpop.f32.mrb[0].mxu0
  %v1160 = vadd.f32 0.0, %v1159
  %v1161 = vpop.f32.mrb[0].mxu0
  %v1162 = vadd.f32 0.0, %v1161
  %1163 = vdwg.mxu0
  %v1164 = vld [vmem:[%s744] sm:$0xff]
  %v1165 = vadd.f32 %v1164, %v1160
  %v1166 = vld [vmem:[%s739 + $0x8] sm:$0xff]
  %v1167 = vadd.f32 %v1166, %v1162
  %v1168 = vxor.u32 %v1165, 2147483648
  %v1169 = vmul.f32 %v1168, 1.442695
  %v1170 = vpow.pop %v1169
  %v1171 = vadd.f32 %v1170, 1.0
  %v1172 = vrcp.pop %v1171
  %v1173 = vmul.f32 1.0, %v1172
  %v1174 = vtanh.pop %v1165
  %v1175 = vmul.f32 %v1173, %v1048
  %1177 = vrot.lane.b32.xlu0 %v1174, 64
  %v1178 = vpop.permute.xlu0 %1177
  %v1180 = vmul.f32 %v1173, %v1178
  %1182 = vrot.lane.b32.xlu0 %v1180, 32
  %v1183 = vpop.permute.xlu0 %1182
  %v1185 = vadd.f32 %v1175, %v1183
  %v1186 = vtanh.pop %v1185
  %1188 = vrot.lane.b32.xlu0 %v1186, 64
  %v1189 = vpop.permute.xlu0 %1188
  %v1191 = vmul.f32 %v1173, %v1189
  %v1192 = vxor.u32 %v1167, 2147483648
  %v1193 = vmul.f32 %v1192, 1.442695
  %v1194 = vpow.pop %v1193
  %v1195 = vadd.f32 %v1194, 1.0
  %v1196 = vrcp.pop %v1195
  %v1197 = vmul.f32 1.0, %v1196
  %v1198 = vtanh.pop %v1167
  %v1199 = vmul.f32 %v1197, %v1072
  %1201 = vrot.lane.b32.xlu0 %v1198, 64
  %v1202 = vpop.permute.xlu0 %1201
  %v1204 = vmul.f32 %v1197, %v1202
  %1206 = vrot.lane.b32.xlu0 %v1204, 32
  %v1207 = vpop.permute.xlu0 %1206
  %v1209 = vadd.f32 %v1199, %v1207
  %v1210 = vtanh.pop %v1209
  %1212 = vrot.lane.b32.xlu0 %v1210, 64
  %v1213 = vpop.permute.xlu0 %1212
  %v1215 = vmul.f32 %v1197, %v1213
  %1217 = vrot.lane.b32.xlu0 %v1191, 32
  %v1218 = vpop.permute.xlu0 %1217
  %1220 = vst.msk [vmem:[%s805] sm:$0xff] %vm202, %v1218
  %1222 = vrot.lane.b32.xlu0 %v1215, 64
  %v1223 = vpop.permute.xlu0 %1222
  %1225 = vst.msk [vmem:[%s799] sm:$0xff] %vm515, %v1223
  %v1226 = vsel %vm202, %v1218, %v1223
  %v1228 = vsel %vm372, %v1226, 0
  %1230 = vmatprep.subr.mxu0 %v357
  %1231 = vmatpush1.msra.mxu0 %v356
  %1232 = vmatprep.subr.mxu0 %v359
  %1233 = vmatpush1.msra.mxu0 %v358
  %1234 = vmatprep.subr.mxu0 %v361
  %1235 = vmatpush1.msra.mxu0 %v360
  %1236 = vmatprep.subr.mxu0 %v363
  %1237 = vmatpush1.msra.mxu0 %v362
  %1238 = vmatprep.subr.mxu0 %v365
  %1239 = vmatpush1.msra.mxu0 %v364
  %1240 = vmatprep.subr.mxu0 %v367
  %1241 = vmatpush1.msra.mxu0 %v366
  %1242 = vmatprep.subr.mxu0 %v369
  %1243 = vmatpush1.msra.mxu0 %v368
  %1244 = vmatprep.subr.mxu0 %v371
  %1245 = vmatpush1.msra.mxu0 %v370
  %1246 = vmatprep.subr.mxu0 0.0
  %1247 = vmatpush1.msra.mxu0 0.0
  %1248 = vmatprep.subr.mxu0 0.0
  %1249 = vmatpush1.msra.mxu0 0.0
  %1250 = vmatprep.subr.mxu0 0.0
  %1251 = vmatpush1.msra.mxu0 0.0
  %1252 = vmatprep.subr.mxu0 0.0
  %1253 = vmatpush1.msra.mxu0 0.0
  %1254 = vmatprep.subr.mxu0 0.0
  %1255 = vmatpush1.msra.mxu0 0.0
  %1256 = vmatprep.subr.mxu0 0.0
  %1257 = vmatpush1.msra.mxu0 0.0
  %1258 = vmatprep.subr.mxu0 0.0
  %1259 = vmatpush1.msra.mxu0 0.0
  %1260 = vmatprep.subr.mxu0 0.0
  %1261 = vmatpush1.msra.mxu0 0.0
  %1262 = vmatprep.subr.mxu0 0.0
  %1263 = vmatpush1.msra.mxu0 0.0
  %1264 = vmatprep.subr.mxu0 0.0
  %1265 = vmatpush1.msra.mxu0 0.0
  %1266 = vmatprep.subr.mxu0 0.0
  %1267 = vmatpush1.msra.mxu0 0.0
  %1268 = vmatprep.subr.mxu0 0.0
  %1269 = vmatpush1.msra.mxu0 0.0
  %1270 = vmatprep.subr.mxu0 0.0
  %1271 = vmatpush1.msra.mxu0 0.0
  %1272 = vmatprep.subr.mxu0 0.0
  %1273 = vmatpush1.msra.mxu0 0.0
  %1274 = vmatprep.subr.mxu0 0.0
  %1275 = vmatpush1.msra.mxu0 0.0
  %1276 = vmatprep.subr.mxu0 0.0
  %1277 = vmatpush1.msra.mxu0 0.0
  %1278 = vmatprep.subr.mxu0 0.0
  %1279 = vmatpush1.msra.mxu0 0.0
  %1280 = vmatprep.subr.mxu0 0.0
  %1281 = vmatpush1.msra.mxu0 0.0
  %1282 = vmatprep.subr.mxu0 0.0
  %1283 = vmatpush1.msra.mxu0 0.0
  %1284 = vmatprep.subr.mxu0 0.0
  %1285 = vmatpush1.msra.mxu0 0.0
  %1286 = vmatprep.subr.mxu0 0.0
  %1287 = vmatpush1.msra.mxu0 0.0
  %1288 = vmatprep.subr.mxu0 0.0
  %1289 = vmatpush1.msra.mxu0 0.0
  %1290 = vmatprep.subr.mxu0 0.0
  %1291 = vmatpush1.msra.mxu0 0.0
  %1292 = vmatprep.subr.mxu0 0.0
  %1293 = vmatpush1.msra.mxu0 0.0
  %1294 = vmatprep.mubr.f32.mxu0 0.0
  %1295 = vmatmul.mubr.f32.gmra.mrb[0].mxu0 %v1228
  %v1296 = vpop.f32.mrb[0].mxu0
  %v1297 = vadd.f32 0.0, %v1296
  %v1298 = vpop.f32.mrb[0].mxu0
  %v1299 = vadd.f32 0.0, %v1298
  %1300 = vdwg.mxu0
  %v1301 = vld [vmem:[%s599] sm:$0xff]
  %v1302 = vadd.f32 %v1301, %v1297
  %v1303 = vld [vmem:[%s594 + $0x8] sm:$0xff]
  %v1304 = vadd.f32 %v1303, %v1299
  %v1305 = vxor.u32 %v1302, 2147483648
  %v1306 = vmul.f32 %v1305, 1.442695
  %v1307 = vpow.pop %v1306
  %v1308 = vadd.f32 %v1307, 1.0
  %v1309 = vrcp.pop %v1308
  %v1310 = vmul.f32 1.0, %v1309
  %v1311 = vtanh.pop %v1302
  %v1312 = vmul.f32 %v1310, %v1185
  %1314 = vrot.lane.b32.xlu0 %v1311, 64
  %v1315 = vpop.permute.xlu0 %1314
  %v1317 = vmul.f32 %v1310, %v1315
  %1319 = vrot.lane.b32.xlu0 %v1317, 32
  %v1320 = vpop.permute.xlu0 %1319
  %v1322 = vadd.f32 %v1312, %v1320
  %v1323 = vtanh.pop %v1322
  %1325 = vrot.lane.b32.xlu0 %v1323, 64
  %v1326 = vpop.permute.xlu0 %1325
  %v1328 = vmul.f32 %v1310, %v1326
  %v1329 = vxor.u32 %v1304, 2147483648
  %v1330 = vmul.f32 %v1329, 1.442695
  %v1331 = vpow.pop %v1330
  %v1332 = vadd.f32 %v1331, 1.0
  %v1333 = vrcp.pop %v1332
  %v1334 = vmul.f32 1.0, %v1333
  %v1335 = vtanh.pop %v1304
  %v1336 = vmul.f32 %v1334, %v1209
  %1338 = vrot.lane.b32.xlu0 %v1335, 64
  %v1339 = vpop.permute.xlu0 %1338
  %v1341 = vmul.f32 %v1334, %v1339
  %1343 = vrot.lane.b32.xlu0 %v1341, 32
  %v1344 = vpop.permute.xlu0 %1343
  %v1346 = vadd.f32 %v1336, %v1344
  %v1347 = vtanh.pop %v1346
  %1349 = vrot.lane.b32.xlu0 %v1347, 64
  %v1350 = vpop.permute.xlu0 %1349
  %v1352 = vmul.f32 %v1334, %v1350
  %1354 = vrot.lane.b32.xlu0 %v1328, 32
  %v1355 = vpop.permute.xlu0 %1354
  %1357 = vst.msk [vmem:[%s660] sm:$0xff] %vm202, %v1355
  %1359 = vrot.lane.b32.xlu0 %v1352, 64
  %v1360 = vpop.permute.xlu0 %1359
  %1362 = vst.msk [vmem:[%s654] sm:$0xff] %vm515, %v1360
  %v1363 = vsel %vm202, %v1355, %v1360
  %v1365 = vsel %vm372, %v1363, 0
  %1367 = vmatprep.subr.mxu0 %v357
  %1368 = vmatpush1.msra.mxu0 %v356
  %1369 = vmatprep.subr.mxu0 %v359
  %1370 = vmatpush1.msra.mxu0 %v358
  %1371 = vmatprep.subr.mxu0 %v361
  %1372 = vmatpush1.msra.mxu0 %v360
  %1373 = vmatprep.subr.mxu0 %v363
  %1374 = vmatpush1.msra.mxu0 %v362
  %1375 = vmatprep.subr.mxu0 %v365
  %1376 = vmatpush1.msra.mxu0 %v364
  %1377 = vmatprep.subr.mxu0 %v367
  %1378 = vmatpush1.msra.mxu0 %v366
  %1379 = vmatprep.subr.mxu0 %v369
  %1380 = vmatpush1.msra.mxu0 %v368
  %1381 = vmatprep.subr.mxu0 %v371
  %1382 = vmatpush1.msra.mxu0 %v370
  %1383 = vmatprep.subr.mxu0 0.0
  %1384 = vmatpush1.msra.mxu0 0.0
  %1385 = vmatprep.subr.mxu0 0.0
  %1386 = vmatpush1.msra.mxu0 0.0
  %1387 = vmatprep.subr.mxu0 0.0
  %1388 = vmatpush1.msra.mxu0 0.0
  %1389 = vmatprep.subr.mxu0 0.0
  %1390 = vmatpush1.msra.mxu0 0.0
  %1391 = vmatprep.subr.mxu0 0.0
  %1392 = vmatpush1.msra.mxu0 0.0
  %1393 = vmatprep.subr.mxu0 0.0
  %1394 = vmatpush1.msra.mxu0 0.0
  %1395 = vmatprep.subr.mxu0 0.0
  %1396 = vmatpush1.msra.mxu0 0.0
  %1397 = vmatprep.subr.mxu0 0.0
  %1398 = vmatpush1.msra.mxu0 0.0
  %1399 = vmatprep.subr.mxu0 0.0
  %1400 = vmatpush1.msra.mxu0 0.0
  %1401 = vmatprep.subr.mxu0 0.0
  %1402 = vmatpush1.msra.mxu0 0.0
  %1403 = vmatprep.subr.mxu0 0.0
  %1404 = vmatpush1.msra.mxu0 0.0
  %1405 = vmatprep.subr.mxu0 0.0
  %1406 = vmatpush1.msra.mxu0 0.0
  %1407 = vmatprep.subr.mxu0 0.0
  %1408 = vmatpush1.msra.mxu0 0.0
  %1409 = vmatprep.subr.mxu0 0.0
  %1410 = vmatpush1.msra.mxu0 0.0
  %1411 = vmatprep.subr.mxu0 0.0
  %1412 = vmatpush1.msra.mxu0 0.0
  %1413 = vmatprep.subr.mxu0 0.0
  %1414 = vmatpush1.msra.mxu0 0.0
  %1415 = vmatprep.subr.mxu0 0.0
  %1416 = vmatpush1.msra.mxu0 0.0
  %1417 = vmatprep.subr.mxu0 0.0
  %1418 = vmatpush1.msra.mxu0 0.0
  %1419 = vmatprep.subr.mxu0 0.0
  %1420 = vmatpush1.msra.mxu0 0.0
  %1421 = vmatprep.subr.mxu0 0.0
  %1422 = vmatpush1.msra.mxu0 0.0
  %1423 = vmatprep.subr.mxu0 0.0
  %1424 = vmatpush1.msra.mxu0 0.0
  %1425 = vmatprep.subr.mxu0 0.0
  %1426 = vmatpush1.msra.mxu0 0.0
  %1427 = vmatprep.subr.mxu0 0.0
  %1428 = vmatpush1.msra.mxu0 0.0
  %1429 = vmatprep.subr.mxu0 0.0
  %1430 = vmatpush1.msra.mxu0 0.0
  %1431 = vmatprep.mubr.f32.mxu0 0.0
  %1432 = vmatmul.mubr.f32.gmra.mrb[0].mxu0 %v1365
  %v1433 = vpop.f32.mrb[0].mxu0
  %v1434 = vadd.f32 0.0, %v1433
  %v1435 = vpop.f32.mrb[0].mxu0
  %v1436 = vadd.f32 0.0, %v1435
  %1437 = vdwg.mxu0
  %v1438 = vld [vmem:[%s454] sm:$0xff]
  %v1439 = vadd.f32 %v1438, %v1434
  %v1440 = vld [vmem:[%s449 + $0x8] sm:$0xff]
  %v1441 = vadd.f32 %v1440, %v1436
  %v1442 = vxor.u32 %v1439, 2147483648
  %v1443 = vmul.f32 %v1442, 1.442695
  %v1444 = vpow.pop %v1443
  %v1445 = vadd.f32 %v1444, 1.0
  %v1446 = vrcp.pop %v1445
  %v1447 = vmul.f32 1.0, %v1446
  %v1448 = vtanh.pop %v1439
  %v1449 = vmul.f32 %v1447, %v1322
  %1451 = vrot.lane.b32.xlu0 %v1448, 64
  %v1452 = vpop.permute.xlu0 %1451
  %v1454 = vmul.f32 %v1447, %v1452
  %1456 = vrot.lane.b32.xlu0 %v1454, 32
  %v1457 = vpop.permute.xlu0 %1456
  %v1459 = vadd.f32 %v1449, %v1457
  %v1460 = vtanh.pop %v1459
  %1462 = vrot.lane.b32.xlu0 %v1460, 64
  %v1463 = vpop.permute.xlu0 %1462
  %v1465 = vmul.f32 %v1447, %v1463
  %v1466 = vxor.u32 %v1441, 2147483648
  %v1467 = vmul.f32 %v1466, 1.442695
  %v1468 = vpow.pop %v1467
  %v1469 = vadd.f32 %v1468, 1.0
  %v1470 = vrcp.pop %v1469
  %v1471 = vmul.f32 1.0, %v1470
  %v1472 = vtanh.pop %v1441
  %v1473 = vmul.f32 %v1471, %v1346
  %1475 = vrot.lane.b32.xlu0 %v1472, 64
  %v1476 = vpop.permute.xlu0 %1475
  %v1478 = vmul.f32 %v1471, %v1476
  %1480 = vrot.lane.b32.xlu0 %v1478, 32
  %v1481 = vpop.permute.xlu0 %1480
  %v1483 = vadd.f32 %v1473, %v1481
  %v1484 = vtanh.pop %v1483
  %1486 = vrot.lane.b32.xlu0 %v1484, 64
  %v1487 = vpop.permute.xlu0 %1486
  %v1489 = vmul.f32 %v1471, %v1487
  %1491 = vrot.lane.b32.xlu0 %v1465, 32
  %v1492 = vpop.permute.xlu0 %1491
  %1494 = vst.msk [vmem:[%s514] sm:$0xff] %vm202, %v1492
  %1496 = vrot.lane.b32.xlu0 %v1489, 64
  %v1497 = vpop.permute.xlu0 %1496
  %1499 = vst.msk [vmem:[%s6] sm:$0xff] %vm515, %v1497
  // Predicated region
  $region26: #{temporal_forward.1} parent=0 // pred_check
    _
  $region27: #{temporal_forward.1} parent=0 // pred_check_branch
    %1501 = sbr.rel (0) target = $region29
  $region28: #{temporal_forward.1} parent=0 // pred_region
    _
  $region29: #{temporal_forward.1} parent=0 // pred_fallthru
    _
  // Predicated region
  $region30: #{temporal_forward.1} parent=0 // pred_check
    _
  $region31: #{temporal_forward.1} parent=0 // pred_check_branch
    %1503 = sbr.rel (0) target = $region33
  $region32: #{temporal_forward.1} parent=0 // pred_region
    _
  $region33: #{temporal_forward.1} parent=0 // pred_fallthru
    _

</llo_original>
